<compile_context>
chip_gen: v5e
topology: v5e:2x2
jax: 0.10.0
libtpu: 0.0.40
codegen_flags: <defaults>
</compile_context>

<pallas_src>
import functools

import jax
import jax.numpy as jnp
from jax.experimental import pallas as pl
from jax.experimental.pallas import tpu as pltpu

LN_EPS = 1e-5  # torch.nn.LayerNorm default


def _layernorm(x, gamma, beta):
    mean = jnp.mean(x, axis=-1, keepdims=True)
    var = jnp.mean((x - mean) ** 2, axis=-1, keepdims=True)
    return (x - mean) * jax.lax.rsqrt(var + LN_EPS) * gamma + beta


def attention_block_kernel(*refs, num_heads, separate_kv):
    if separate_kv:
        (xq_ref, xkv_ref,
         ln1g_ref, ln1b_ref,
         wq_ref, wk_ref, wv_ref, wo_ref, bo_ref,
         ln2g_ref, ln2b_ref,
         w1_ref, b1_ref, w2_ref, b2_ref,
         o_ref) = refs
    else:
        (xq_ref,
         ln1g_ref, ln1b_ref,
         wq_ref, wk_ref, wv_ref, wo_ref, bo_ref,
         ln2g_ref, ln2b_ref,
         w1_ref, b1_ref, w2_ref, b2_ref,
         o_ref) = refs
        xkv_ref = None

    f32 = jnp.float32
    bf16 = jnp.bfloat16

    xq = xq_ref[...].astype(f32)                     # [TQ, E]
    TQ, E = xq.shape
    D = E // num_heads
    scale = E ** (-0.5)  # NOTE: embedding_size**-0.5, exactly as in the PyTorch module

    # ---- LN1 (f32) ----
    xn_q = _layernorm(xq, ln1g_ref[...], ln1b_ref[...])
    if xkv_ref is None:                              # single query tile covers the whole sequence
        xn_kv = xn_q
    else:
        xn_kv = _layernorm(xkv_ref[...].astype(f32), ln1g_ref[...], ln1b_ref[...])

    xnq_bf = xn_q.astype(bf16)
    xnkv_bf = xn_kv.astype(bf16)

    # ---- fused full-width projections (bf16 MXU operands, f32 accumulation) ----
    q = jnp.dot(xnq_bf, wq_ref[...], preferred_element_type=f32) * scale   # [TQ, E] (scale folded)
    k = jnp.dot(xnkv_bf, wk_ref[...], preferred_element_type=f32)          # [L,  E]
    v = jnp.dot(xnkv_bf, wv_ref[...], preferred_element_type=f32)          # [L,  E]

    q_bf = q.astype(bf16)
    k_bf = k.astype(bf16)
    v_bf = v.astype(bf16)

    # ---- per-head attention core (softmax in f32) fused with the output projection ----
    # sum_h (softmax(q_h k_h^T) v_h) @ Wo[h*D:(h+1)*D, :]  ==  concat_h(...) @ Wo
    attn_out = jnp.zeros((TQ, E), f32)
    for h in range(num_heads):
        sl = slice(h * D, (h + 1) * D)
        sc = jax.lax.dot_general(                                          # [TQ, L]
            q_bf[:, sl], k_bf[:, sl], (((1,), (1,)), ((), ())),
            preferred_element_type=f32)
        m = jnp.max(sc, axis=-1, keepdims=True)
        p = jnp.exp(sc - m)
        attn = p * pl.reciprocal(jnp.sum(p, axis=-1, keepdims=True), approx=True)
        oh = jnp.dot(attn.astype(bf16), v_bf[:, sl],                       # [TQ, D]
                     preferred_element_type=f32)
        attn_out = attn_out + jnp.dot(oh.astype(bf16), wo_ref[sl, :],      # [TQ, E]
                                      preferred_element_type=f32)

    # ---- output bias + residual 1 (dropout = identity in eval) ----
    x1 = xq + attn_out + bo_ref[...]

    # ---- LN2 + FFN (Linear -> SiLU -> Linear) + residual 2 ----
    xn2 = _layernorm(x1, ln2g_ref[...], ln2b_ref[...])
    h1 = jnp.dot(xn2.astype(bf16), w1_ref[...], preferred_element_type=f32) + b1_ref[...]
    h1 = h1 * jax.nn.sigmoid(h1)                                           # SiLU in f32
    ffn = jnp.dot(h1.astype(bf16), w2_ref[...], preferred_element_type=f32) + b2_ref[...]

    o_ref[...] = (x1 + ffn).astype(o_ref.dtype)


def _vmem_limit_bytes(E, F, L, TQ, separate_kv):
    w = (4 * E * E + 2 * E * F) * 2                 # bf16 weights
    biases = (6 * E + F) * 4                        # f32 LN params / biases
    acts = (TQ * E + (L * E if separate_kv else 0)) * 4   # input blocks (f32)
    out = TQ * E * 4
    est = 2 * (w + biases + acts + out) + (8 << 20)        # 2x double buffering + slack
    return int(min(64 << 20, max(16 << 20, est)))          # cap at v7x physical VMEM


def attention_block(x, params, heads):
    """x: [N, L, E] float32.  params: dict of weights (see init_params)."""
    N, L, E = x.shape
    F = params["w1"].shape[1]
    assert E % heads == 0

    TQ = L if L <= 128 else 128
    assert L % TQ == 0, "L must be a multiple of the query tile"
    nq = L // TQ
    separate_kv = nq > 1

    def rep(shape):
        return pl.BlockSpec(shape, lambda b, qi: tuple(0 for _ in shape))

    in_specs = [pl.BlockSpec((None, TQ, E), lambda b, qi: (b, qi, 0))]   # x (query tile)
    args = [x]
    if separate_kv:
        in_specs.append(pl.BlockSpec((None, L, E), lambda b, qi: (b, 0, 0)))  # full seq for K/V
        args.append(x)
    in_specs += [
        rep((1, E)),            # ln1 gamma
        rep((1, E)),            # ln1 beta
        rep((E, E)),            # wq
        rep((E, E)),            # wk
        rep((E, E)),            # wv
        rep((E, E)),            # wo
        rep((1, E)),            # bo
        rep((1, E)),            # ln2 gamma
        rep((1, E)),            # ln2 beta
        rep((E, F)),            # w1
        rep((1, F)),            # b1
        rep((F, E)),            # w2
        rep((1, E)),            # b2
    ]
    args += [
        params["ln1_g"], params["ln1_b"],
        params["wq"], params["wk"], params["wv"],
        params["wo"], params["bo"],
        params["ln2_g"], params["ln2_b"],
        params["w1"], params["b1"], params["w2"], params["b2"],
    ]

    grid_spec = pltpu.PrefetchScalarGridSpec(
        num_scalar_prefetch=0,
        grid=(N, nq),
        in_specs=in_specs,
        out_specs=pl.BlockSpec((None, TQ, E), lambda b, qi: (b, qi, 0)),
    )

    kernel = functools.partial(attention_block_kernel, num_heads=heads,
                               separate_kv=separate_kv)

    return pl.pallas_call(
        kernel,
        out_shape=jax.ShapeDtypeStruct((N, L, E), x.dtype),
        grid_spec=grid_spec,
        compiler_params=pltpu.CompilerParams(
            dimension_semantics=("parallel", "parallel"),
            vmem_limit_bytes=_vmem_limit_bytes(E, F, L, TQ, separate_kv),
        ),
    )(*args)


def init_params(key, embedding_size, heads, ffn_expansion):
    """Deterministic synthetic parameters matching the PyTorch module's shapes.

    Projections are stored as (in, out) [E, E]; head h owns output columns [h*D:(h+1)*D]
    of wq/wk/wv and input rows [h*D:(h+1)*D] of wo. Matmul weights are bf16 (MXU-native),
    LayerNorm params and biases are f32.
    """
    E = embedding_size
    F = E * ffn_expansion
    ks = jax.random.split(key, 8)
    std = 0.05
    bf16 = jnp.bfloat16

    wq = (jax.random.normal(ks[0], (E, E)) * std).astype(bf16)
    wk = (jax.random.normal(ks[1], (E, E)) * std).astype(bf16)
    wv = (jax.random.normal(ks[2], (E, E)) * std).astype(bf16)
    wo = (jax.random.normal(ks[3], (E, E)) * std).astype(bf16)
    bo = (jax.random.normal(ks[4], (1, E)) * std).astype(jnp.float32)

    w1 = (jax.random.normal(ks[5], (E, F)) * std).astype(bf16)
    b1 = (jax.random.normal(ks[6], (1, F)) * std).astype(jnp.float32)
    w2 = (jax.random.normal(ks[7], (F, E)) * std).astype(bf16)
    b2 = jnp.zeros((1, E), jnp.float32)

    return dict(
        ln1_g=jnp.ones((1, E), jnp.float32), ln1_b=jnp.zeros((1, E), jnp.float32),
        wq=wq, wk=wk, wv=wv, wo=wo, bo=bo,
        ln2_g=jnp.ones((1, E), jnp.float32), ln2_b=jnp.zeros((1, E), jnp.float32),
        w1=w1, b1=b1, w2=w2, b2=b2,
    )


def reference(x, params, heads):
    """Plain-JAX f32 reference mirroring the PyTorch forward (eval mode).

    Uses the same (bf16-quantized) weight values, upcast to f32.
    """
    N, L, E = x.shape
    D = E // heads
    scale = E ** (-0.5)
    f32 = jnp.float32

    def ln(v, g, b):
        m = jnp.mean(v, axis=-1, keepdims=True)
        var = jnp.mean((v - m) ** 2, axis=-1, keepdims=True)
        return (v - m) / jnp.sqrt(var + LN_EPS) * g + b

    skip = x
    xn = ln(x, params["ln1_g"], params["ln1_b"])
    q = (xn @ params["wq"].astype(f32)).reshape(N, L, heads, D)
    k = (xn @ params["wk"].astype(f32)).reshape(N, L, heads, D)
    v = (xn @ params["wv"].astype(f32)).reshape(N, L, heads, D)
    qk = jnp.einsum("nqhd,nkhd->nhqk", q, k)
    attn = jax.nn.softmax(qk * scale, axis=3)
    out = jnp.einsum("nhql,nlhd->nqhd", attn, v).reshape(N, L, E)
    out = out @ params["wo"].astype(f32) + params["bo"]
    x1 = out + skip
    skip = x1
    xn2 = ln(x1, params["ln2_g"], params["ln2_b"])
    h1 = xn2 @ params["w1"].astype(f32) + params["b1"]
    h1 = h1 * jax.nn.sigmoid(h1)
    ffn = h1 @ params["w2"].astype(f32) + params["b2"]
    return ffn + skip


if __name__ == "__main__":
    N, L, E = 2, 8, 32
    heads, ffn_expansion = 4, 2

    key = jax.random.PRNGKey(0)
    kx, kp = jax.random.split(key)
    x = jax.random.normal(kx, (N, L, E), jnp.float32)
    params = init_params(kp, E, heads, ffn_expansion)

    out = jax.block_until_ready(attention_block(x, params, heads))
    ref = jax.block_until_ready(reference(x, params, heads))

    assert out.shape == (N, L, E)
    max_err = jnp.max(jnp.abs(out - ref))
    # bf16 MXU operands + approx reciprocal vs. pure-f32 reference -> tolerance in the 1e-2 range.
    assert jnp.allclose(out, ref, atol=2.5e-2, rtol=2.5e-2), f"max abs err = {max_err}"
    print("KERNEL_OK")
</pallas_src>

<mosaic_0001>
module attributes {stable_mosaic.version = 11 : i64} {
  func.func @attention_block_kernel(%arg0: i32, %arg1: i32, %arg2: memref<1x8x32xf32, #tpu.memory_space<vmem>>, %arg3: memref<1x32xf32, #tpu.memory_space<vmem>>, %arg4: memref<1x32xf32, #tpu.memory_space<vmem>>, %arg5: memref<32x32xbf16, #tpu.memory_space<vmem>>, %arg6: memref<32x32xbf16, #tpu.memory_space<vmem>>, %arg7: memref<32x32xbf16, #tpu.memory_space<vmem>>, %arg8: memref<32x32xbf16, #tpu.memory_space<vmem>>, %arg9: memref<1x32xf32, #tpu.memory_space<vmem>>, %arg10: memref<1x32xf32, #tpu.memory_space<vmem>>, %arg11: memref<1x32xf32, #tpu.memory_space<vmem>>, %arg12: memref<32x64xbf16, #tpu.memory_space<vmem>>, %arg13: memref<1x64xf32, #tpu.memory_space<vmem>>, %arg14: memref<64x32xbf16, #tpu.memory_space<vmem>>, %arg15: memref<1x32xf32, #tpu.memory_space<vmem>>, %arg16: memref<1x8x32xf32, #tpu.memory_space<vmem>>) attributes {dimension_semantics = [#tpu.dimension_semantics<parallel>, #tpu.dimension_semantics<parallel>], iteration_bounds = array<i64: 2, 1>, scalar_prefetch = 0 : i64, scratch_operands = 0 : i64, tpu.core_type = #tpu.core_type<tc>, window_params = [{transform_indices = @transform_0, window_bounds = array<i64: 1, 8, 32>}, {pipeline_mode = #tpu.pipeline_mode<synchronous>, transform_indices = @transform_1, window_bounds = array<i64: 1, 32>}, {pipeline_mode = #tpu.pipeline_mode<synchronous>, transform_indices = @transform_2, window_bounds = array<i64: 1, 32>}, {pipeline_mode = #tpu.pipeline_mode<synchronous>, transform_indices = @transform_3, window_bounds = array<i64: 32, 32>}, {pipeline_mode = #tpu.pipeline_mode<synchronous>, transform_indices = @transform_4, window_bounds = array<i64: 32, 32>}, {pipeline_mode = #tpu.pipeline_mode<synchronous>, transform_indices = @transform_5, window_bounds = array<i64: 32, 32>}, {pipeline_mode = #tpu.pipeline_mode<synchronous>, transform_indices = @transform_6, window_bounds = array<i64: 32, 32>}, {pipeline_mode = #tpu.pipeline_mode<synchronous>, transform_indices = @transform_7, window_bounds = array<i64: 1, 32>}, {pipeline_mode = #tpu.pipeline_mode<synchronous>, transform_indices = @transform_8, window_bounds = array<i64: 1, 32>}, {pipeline_mode = #tpu.pipeline_mode<synchronous>, transform_indices = @transform_9, window_bounds = array<i64: 1, 32>}, {pipeline_mode = #tpu.pipeline_mode<synchronous>, transform_indices = @transform_10, window_bounds = array<i64: 32, 64>}, {pipeline_mode = #tpu.pipeline_mode<synchronous>, transform_indices = @transform_11, window_bounds = array<i64: 1, 64>}, {pipeline_mode = #tpu.pipeline_mode<synchronous>, transform_indices = @transform_12, window_bounds = array<i64: 64, 32>}, {pipeline_mode = #tpu.pipeline_mode<synchronous>, transform_indices = @transform_13, window_bounds = array<i64: 1, 32>}, {transform_indices = @transform_14, window_bounds = array<i64: 1, 8, 32>}]} {
    %c0 = arith.constant 0 : index
    %c0_0 = arith.constant 0 : index
    %c0_1 = arith.constant 0 : index
    %0 = vector.load %arg2[%c0, %c0_0, %c0_1] : memref<1x8x32xf32, #tpu.memory_space<vmem>>, vector<1x8x32xf32>
    %1 = vector.shape_cast %0 : vector<1x8x32xf32> to vector<8x32xf32>
    %c0_2 = arith.constant 0 : index
    %c0_3 = arith.constant 0 : index
    %2 = vector.load %arg3[%c0_2, %c0_3] : memref<1x32xf32, #tpu.memory_space<vmem>>, vector<1x32xf32>
    %c0_4 = arith.constant 0 : index
    %c0_5 = arith.constant 0 : index
    %3 = vector.load %arg4[%c0_4, %c0_5] : memref<1x32xf32, #tpu.memory_space<vmem>>, vector<1x32xf32>
    %cst = arith.constant dense<0.000000e+00> : vector<8xf32>
    %4 = vector.multi_reduction <add>, %1, %cst [1] : vector<8x32xf32> to vector<8xf32>
    %5 = vector.shape_cast %4 : vector<8xf32> to vector<8x1xf32>
    %cst_6 = arith.constant 3.200000e+01 : f32
    %6 = vector.broadcast %cst_6 : f32 to vector<8x1xf32>
    %7 = arith.divf %5, %6 : vector<8x1xf32>
    %8 = vector.broadcast %7 : vector<8x1xf32> to vector<8x32xf32>
    %9 = arith.subf %1, %8 : vector<8x32xf32>
    %10 = arith.mulf %9, %9 : vector<8x32xf32>
    %cst_7 = arith.constant dense<0.000000e+00> : vector<8xf32>
    %11 = vector.multi_reduction <add>, %10, %cst_7 [1] : vector<8x32xf32> to vector<8xf32>
    %12 = vector.shape_cast %11 : vector<8xf32> to vector<8x1xf32>
    %cst_8 = arith.constant 3.200000e+01 : f32
    %13 = vector.broadcast %cst_8 : f32 to vector<8x1xf32>
    %14 = arith.divf %12, %13 : vector<8x1xf32>
    %15 = vector.broadcast %7 : vector<8x1xf32> to vector<8x32xf32>
    %16 = arith.subf %1, %15 : vector<8x32xf32>
    %cst_9 = arith.constant 9.99999974E-6 : f32
    %17 = vector.broadcast %cst_9 : f32 to vector<8x1xf32>
    %18 = arith.addf %14, %17 : vector<8x1xf32>
    %19 = math.rsqrt %18 : vector<8x1xf32>
    %20 = vector.broadcast %19 : vector<8x1xf32> to vector<8x32xf32>
    %21 = arith.mulf %16, %20 : vector<8x32xf32>
    %22 = vector.broadcast %2 : vector<1x32xf32> to vector<8x32xf32>
    %23 = arith.mulf %21, %22 : vector<8x32xf32>
    %24 = vector.broadcast %3 : vector<1x32xf32> to vector<8x32xf32>
    %25 = arith.addf %23, %24 : vector<8x32xf32>
    %26 = arith.truncf %25 : vector<8x32xf32> to vector<8x32xbf16>
    %27 = arith.truncf %25 : vector<8x32xf32> to vector<8x32xbf16>
    %c0_10 = arith.constant 0 : index
    %c0_11 = arith.constant 0 : index
    %28 = vector.load %arg5[%c0_10, %c0_11] : memref<32x32xbf16, #tpu.memory_space<vmem>>, vector<32x32xbf16>
    %cst_12 = arith.constant dense<0.000000e+00> : vector<8x32xf32>
    %29 = tpu.matmul %26, %28, %cst_12 {dimension_numbers = #tpu.dot_dimension_numbers<[1], [0], [0], [1], [0, 0, 1, 1], [], []>} : vector<8x32xbf16>, vector<32x32xbf16>, vector<8x32xf32> -> vector<8x32xf32>
    %cst_13 = arith.constant 0.176776692 : f32
    %30 = vector.broadcast %cst_13 : f32 to vector<8x32xf32>
    %31 = arith.mulf %29, %30 : vector<8x32xf32>
    %c0_14 = arith.constant 0 : index
    %c0_15 = arith.constant 0 : index
    %32 = vector.load %arg6[%c0_14, %c0_15] : memref<32x32xbf16, #tpu.memory_space<vmem>>, vector<32x32xbf16>
    %cst_16 = arith.constant dense<0.000000e+00> : vector<8x32xf32>
    %33 = tpu.matmul %27, %32, %cst_16 {dimension_numbers = #tpu.dot_dimension_numbers<[1], [0], [0], [1], [0, 0, 1, 1], [], []>} : vector<8x32xbf16>, vector<32x32xbf16>, vector<8x32xf32> -> vector<8x32xf32>
    %c0_17 = arith.constant 0 : index
    %c0_18 = arith.constant 0 : index
    %34 = vector.load %arg7[%c0_17, %c0_18] : memref<32x32xbf16, #tpu.memory_space<vmem>>, vector<32x32xbf16>
    %cst_19 = arith.constant dense<0.000000e+00> : vector<8x32xf32>
    %35 = tpu.matmul %27, %34, %cst_19 {dimension_numbers = #tpu.dot_dimension_numbers<[1], [0], [0], [1], [0, 0, 1, 1], [], []>} : vector<8x32xbf16>, vector<32x32xbf16>, vector<8x32xf32> -> vector<8x32xf32>
    %36 = arith.truncf %31 : vector<8x32xf32> to vector<8x32xbf16>
    %37 = arith.truncf %33 : vector<8x32xf32> to vector<8x32xbf16>
    %38 = arith.truncf %35 : vector<8x32xf32> to vector<8x32xbf16>
    %cst_20 = arith.constant 0.000000e+00 : f32
    %39 = vector.broadcast %cst_20 : f32 to vector<8x32xf32>
    %40 = vector.extract_strided_slice %36 {offsets = [0, 0], sizes = [8, 8], strides = [1, 1]} : vector<8x32xbf16> to vector<8x8xbf16>
    %41 = vector.extract_strided_slice %37 {offsets = [0, 0], sizes = [8, 8], strides = [1, 1]} : vector<8x32xbf16> to vector<8x8xbf16>
    %cst_21 = arith.constant dense<0.000000e+00> : vector<8x8xf32>
    %42 = tpu.matmul %40, %41, %cst_21 {dimension_numbers = #tpu.dot_dimension_numbers<[1], [1], [0], [0], [0, 0, 1, 0], [], []>} : vector<8x8xbf16>, vector<8x8xbf16>, vector<8x8xf32> -> vector<8x8xf32>
    %cst_22 = arith.constant dense<0xFF800000> : vector<8xf32>
    %43 = vector.multi_reduction <maximumf>, %42, %cst_22 [1] : vector<8x8xf32> to vector<8xf32>
    %44 = vector.shape_cast %43 : vector<8xf32> to vector<8x1xf32>
    %45 = vector.broadcast %44 : vector<8x1xf32> to vector<8x8xf32>
    %46 = arith.subf %42, %45 : vector<8x8xf32>
    %47 = math.exp %46 : vector<8x8xf32>
    %cst_23 = arith.constant dense<0.000000e+00> : vector<8xf32>
    %48 = vector.multi_reduction <add>, %47, %cst_23 [1] : vector<8x8xf32> to vector<8xf32>
    %49 = vector.shape_cast %48 : vector<8xf32> to vector<8x1xf32>
    %50 = tpu.reciprocal %49 {approx = true} : vector<8x1xf32> -> vector<8x1xf32>
    %51 = vector.broadcast %50 : vector<8x1xf32> to vector<8x8xf32>
    %52 = arith.mulf %47, %51 : vector<8x8xf32>
    %53 = arith.truncf %52 : vector<8x8xf32> to vector<8x8xbf16>
    %54 = vector.extract_strided_slice %38 {offsets = [0, 0], sizes = [8, 8], strides = [1, 1]} : vector<8x32xbf16> to vector<8x8xbf16>
    %cst_24 = arith.constant dense<0.000000e+00> : vector<8x8xf32>
    %55 = tpu.matmul %53, %54, %cst_24 {dimension_numbers = #tpu.dot_dimension_numbers<[1], [0], [0], [1], [0, 0, 1, 1], [], []>} : vector<8x8xbf16>, vector<8x8xbf16>, vector<8x8xf32> -> vector<8x8xf32>
    %56 = arith.truncf %55 : vector<8x8xf32> to vector<8x8xbf16>
    %c0_25 = arith.constant 0 : index
    %c0_26 = arith.constant 0 : index
    %57 = vector.load %arg8[%c0_25, %c0_26] : memref<32x32xbf16, #tpu.memory_space<vmem>>, vector<8x32xbf16>
    %cst_27 = arith.constant dense<0.000000e+00> : vector<8x32xf32>
    %58 = tpu.matmul %56, %57, %cst_27 {dimension_numbers = #tpu.dot_dimension_numbers<[1], [0], [0], [1], [0, 0, 1, 1], [], []>} : vector<8x8xbf16>, vector<8x32xbf16>, vector<8x32xf32> -> vector<8x32xf32>
    %59 = arith.addf %39, %58 : vector<8x32xf32>
    %60 = vector.extract_strided_slice %36 {offsets = [0, 8], sizes = [8, 8], strides = [1, 1]} : vector<8x32xbf16> to vector<8x8xbf16>
    %61 = vector.extract_strided_slice %37 {offsets = [0, 8], sizes = [8, 8], strides = [1, 1]} : vector<8x32xbf16> to vector<8x8xbf16>
    %cst_28 = arith.constant dense<0.000000e+00> : vector<8x8xf32>
    %62 = tpu.matmul %60, %61, %cst_28 {dimension_numbers = #tpu.dot_dimension_numbers<[1], [1], [0], [0], [0, 0, 1, 0], [], []>} : vector<8x8xbf16>, vector<8x8xbf16>, vector<8x8xf32> -> vector<8x8xf32>
    %cst_29 = arith.constant dense<0xFF800000> : vector<8xf32>
    %63 = vector.multi_reduction <maximumf>, %62, %cst_29 [1] : vector<8x8xf32> to vector<8xf32>
    %64 = vector.shape_cast %63 : vector<8xf32> to vector<8x1xf32>
    %65 = vector.broadcast %64 : vector<8x1xf32> to vector<8x8xf32>
    %66 = arith.subf %62, %65 : vector<8x8xf32>
    %67 = math.exp %66 : vector<8x8xf32>
    %cst_30 = arith.constant dense<0.000000e+00> : vector<8xf32>
    %68 = vector.multi_reduction <add>, %67, %cst_30 [1] : vector<8x8xf32> to vector<8xf32>
    %69 = vector.shape_cast %68 : vector<8xf32> to vector<8x1xf32>
    %70 = tpu.reciprocal %69 {approx = true} : vector<8x1xf32> -> vector<8x1xf32>
    %71 = vector.broadcast %70 : vector<8x1xf32> to vector<8x8xf32>
    %72 = arith.mulf %67, %71 : vector<8x8xf32>
    %73 = arith.truncf %72 : vector<8x8xf32> to vector<8x8xbf16>
    %74 = vector.extract_strided_slice %38 {offsets = [0, 8], sizes = [8, 8], strides = [1, 1]} : vector<8x32xbf16> to vector<8x8xbf16>
    %cst_31 = arith.constant dense<0.000000e+00> : vector<8x8xf32>
    %75 = tpu.matmul %73, %74, %cst_31 {dimension_numbers = #tpu.dot_dimension_numbers<[1], [0], [0], [1], [0, 0, 1, 1], [], []>} : vector<8x8xbf16>, vector<8x8xbf16>, vector<8x8xf32> -> vector<8x8xf32>
    %76 = arith.truncf %75 : vector<8x8xf32> to vector<8x8xbf16>
    %c8 = arith.constant 8 : index
    %c0_32 = arith.constant 0 : index
    %77 = vector.load %arg8[%c8, %c0_32] : memref<32x32xbf16, #tpu.memory_space<vmem>>, vector<8x32xbf16>
    %cst_33 = arith.constant dense<0.000000e+00> : vector<8x32xf32>
    %78 = tpu.matmul %76, %77, %cst_33 {dimension_numbers = #tpu.dot_dimension_numbers<[1], [0], [0], [1], [0, 0, 1, 1], [], []>} : vector<8x8xbf16>, vector<8x32xbf16>, vector<8x32xf32> -> vector<8x32xf32>
    %79 = arith.addf %59, %78 : vector<8x32xf32>
    %80 = vector.extract_strided_slice %36 {offsets = [0, 16], sizes = [8, 8], strides = [1, 1]} : vector<8x32xbf16> to vector<8x8xbf16>
    %81 = vector.extract_strided_slice %37 {offsets = [0, 16], sizes = [8, 8], strides = [1, 1]} : vector<8x32xbf16> to vector<8x8xbf16>
    %cst_34 = arith.constant dense<0.000000e+00> : vector<8x8xf32>
    %82 = tpu.matmul %80, %81, %cst_34 {dimension_numbers = #tpu.dot_dimension_numbers<[1], [1], [0], [0], [0, 0, 1, 0], [], []>} : vector<8x8xbf16>, vector<8x8xbf16>, vector<8x8xf32> -> vector<8x8xf32>
    %cst_35 = arith.constant dense<0xFF800000> : vector<8xf32>
    %83 = vector.multi_reduction <maximumf>, %82, %cst_35 [1] : vector<8x8xf32> to vector<8xf32>
    %84 = vector.shape_cast %83 : vector<8xf32> to vector<8x1xf32>
    %85 = vector.broadcast %84 : vector<8x1xf32> to vector<8x8xf32>
    %86 = arith.subf %82, %85 : vector<8x8xf32>
    %87 = math.exp %86 : vector<8x8xf32>
    %cst_36 = arith.constant dense<0.000000e+00> : vector<8xf32>
    %88 = vector.multi_reduction <add>, %87, %cst_36 [1] : vector<8x8xf32> to vector<8xf32>
    %89 = vector.shape_cast %88 : vector<8xf32> to vector<8x1xf32>
    %90 = tpu.reciprocal %89 {approx = true} : vector<8x1xf32> -> vector<8x1xf32>
    %91 = vector.broadcast %90 : vector<8x1xf32> to vector<8x8xf32>
    %92 = arith.mulf %87, %91 : vector<8x8xf32>
    %93 = arith.truncf %92 : vector<8x8xf32> to vector<8x8xbf16>
    %94 = vector.extract_strided_slice %38 {offsets = [0, 16], sizes = [8, 8], strides = [1, 1]} : vector<8x32xbf16> to vector<8x8xbf16>
    %cst_37 = arith.constant dense<0.000000e+00> : vector<8x8xf32>
    %95 = tpu.matmul %93, %94, %cst_37 {dimension_numbers = #tpu.dot_dimension_numbers<[1], [0], [0], [1], [0, 0, 1, 1], [], []>} : vector<8x8xbf16>, vector<8x8xbf16>, vector<8x8xf32> -> vector<8x8xf32>
    %96 = arith.truncf %95 : vector<8x8xf32> to vector<8x8xbf16>
    %c16 = arith.constant 16 : index
    %c0_38 = arith.constant 0 : index
    %97 = vector.load %arg8[%c16, %c0_38] : memref<32x32xbf16, #tpu.memory_space<vmem>>, vector<8x32xbf16>
    %cst_39 = arith.constant dense<0.000000e+00> : vector<8x32xf32>
    %98 = tpu.matmul %96, %97, %cst_39 {dimension_numbers = #tpu.dot_dimension_numbers<[1], [0], [0], [1], [0, 0, 1, 1], [], []>} : vector<8x8xbf16>, vector<8x32xbf16>, vector<8x32xf32> -> vector<8x32xf32>
    %99 = arith.addf %79, %98 : vector<8x32xf32>
    %100 = vector.extract_strided_slice %36 {offsets = [0, 24], sizes = [8, 8], strides = [1, 1]} : vector<8x32xbf16> to vector<8x8xbf16>
    %101 = vector.extract_strided_slice %37 {offsets = [0, 24], sizes = [8, 8], strides = [1, 1]} : vector<8x32xbf16> to vector<8x8xbf16>
    %cst_40 = arith.constant dense<0.000000e+00> : vector<8x8xf32>
    %102 = tpu.matmul %100, %101, %cst_40 {dimension_numbers = #tpu.dot_dimension_numbers<[1], [1], [0], [0], [0, 0, 1, 0], [], []>} : vector<8x8xbf16>, vector<8x8xbf16>, vector<8x8xf32> -> vector<8x8xf32>
    %cst_41 = arith.constant dense<0xFF800000> : vector<8xf32>
    %103 = vector.multi_reduction <maximumf>, %102, %cst_41 [1] : vector<8x8xf32> to vector<8xf32>
    %104 = vector.shape_cast %103 : vector<8xf32> to vector<8x1xf32>
    %105 = vector.broadcast %104 : vector<8x1xf32> to vector<8x8xf32>
    %106 = arith.subf %102, %105 : vector<8x8xf32>
    %107 = math.exp %106 : vector<8x8xf32>
    %cst_42 = arith.constant dense<0.000000e+00> : vector<8xf32>
    %108 = vector.multi_reduction <add>, %107, %cst_42 [1] : vector<8x8xf32> to vector<8xf32>
    %109 = vector.shape_cast %108 : vector<8xf32> to vector<8x1xf32>
    %110 = tpu.reciprocal %109 {approx = true} : vector<8x1xf32> -> vector<8x1xf32>
    %111 = vector.broadcast %110 : vector<8x1xf32> to vector<8x8xf32>
    %112 = arith.mulf %107, %111 : vector<8x8xf32>
    %113 = arith.truncf %112 : vector<8x8xf32> to vector<8x8xbf16>
    %114 = vector.extract_strided_slice %38 {offsets = [0, 24], sizes = [8, 8], strides = [1, 1]} : vector<8x32xbf16> to vector<8x8xbf16>
    %cst_43 = arith.constant dense<0.000000e+00> : vector<8x8xf32>
    %115 = tpu.matmul %113, %114, %cst_43 {dimension_numbers = #tpu.dot_dimension_numbers<[1], [0], [0], [1], [0, 0, 1, 1], [], []>} : vector<8x8xbf16>, vector<8x8xbf16>, vector<8x8xf32> -> vector<8x8xf32>
    %116 = arith.truncf %115 : vector<8x8xf32> to vector<8x8xbf16>
    %c24 = arith.constant 24 : index
    %c0_44 = arith.constant 0 : index
    %117 = vector.load %arg8[%c24, %c0_44] : memref<32x32xbf16, #tpu.memory_space<vmem>>, vector<8x32xbf16>
    %cst_45 = arith.constant dense<0.000000e+00> : vector<8x32xf32>
    %118 = tpu.matmul %116, %117, %cst_45 {dimension_numbers = #tpu.dot_dimension_numbers<[1], [0], [0], [1], [0, 0, 1, 1], [], []>} : vector<8x8xbf16>, vector<8x32xbf16>, vector<8x32xf32> -> vector<8x32xf32>
    %119 = arith.addf %99, %118 : vector<8x32xf32>
    %120 = arith.addf %1, %119 : vector<8x32xf32>
    %c0_46 = arith.constant 0 : index
    %c0_47 = arith.constant 0 : index
    %121 = vector.load %arg9[%c0_46, %c0_47] : memref<1x32xf32, #tpu.memory_space<vmem>>, vector<1x32xf32>
    %122 = vector.broadcast %121 : vector<1x32xf32> to vector<8x32xf32>
    %123 = arith.addf %120, %122 : vector<8x32xf32>
    %c0_48 = arith.constant 0 : index
    %c0_49 = arith.constant 0 : index
    %124 = vector.load %arg10[%c0_48, %c0_49] : memref<1x32xf32, #tpu.memory_space<vmem>>, vector<1x32xf32>
    %c0_50 = arith.constant 0 : index
    %c0_51 = arith.constant 0 : index
    %125 = vector.load %arg11[%c0_50, %c0_51] : memref<1x32xf32, #tpu.memory_space<vmem>>, vector<1x32xf32>
    %cst_52 = arith.constant dense<0.000000e+00> : vector<8xf32>
    %126 = vector.multi_reduction <add>, %123, %cst_52 [1] : vector<8x32xf32> to vector<8xf32>
    %127 = vector.shape_cast %126 : vector<8xf32> to vector<8x1xf32>
    %cst_53 = arith.constant 3.200000e+01 : f32
    %128 = vector.broadcast %cst_53 : f32 to vector<8x1xf32>
    %129 = arith.divf %127, %128 : vector<8x1xf32>
    %130 = vector.broadcast %129 : vector<8x1xf32> to vector<8x32xf32>
    %131 = arith.subf %123, %130 : vector<8x32xf32>
    %132 = arith.mulf %131, %131 : vector<8x32xf32>
    %cst_54 = arith.constant dense<0.000000e+00> : vector<8xf32>
    %133 = vector.multi_reduction <add>, %132, %cst_54 [1] : vector<8x32xf32> to vector<8xf32>
    %134 = vector.shape_cast %133 : vector<8xf32> to vector<8x1xf32>
    %cst_55 = arith.constant 3.200000e+01 : f32
    %135 = vector.broadcast %cst_55 : f32 to vector<8x1xf32>
    %136 = arith.divf %134, %135 : vector<8x1xf32>
    %137 = vector.broadcast %129 : vector<8x1xf32> to vector<8x32xf32>
    %138 = arith.subf %123, %137 : vector<8x32xf32>
    %cst_56 = arith.constant 9.99999974E-6 : f32
    %139 = vector.broadcast %cst_56 : f32 to vector<8x1xf32>
    %140 = arith.addf %136, %139 : vector<8x1xf32>
    %141 = math.rsqrt %140 : vector<8x1xf32>
    %142 = vector.broadcast %141 : vector<8x1xf32> to vector<8x32xf32>
    %143 = arith.mulf %138, %142 : vector<8x32xf32>
    %144 = vector.broadcast %124 : vector<1x32xf32> to vector<8x32xf32>
    %145 = arith.mulf %143, %144 : vector<8x32xf32>
    %146 = vector.broadcast %125 : vector<1x32xf32> to vector<8x32xf32>
    %147 = arith.addf %145, %146 : vector<8x32xf32>
    %148 = arith.truncf %147 : vector<8x32xf32> to vector<8x32xbf16>
    %c0_57 = arith.constant 0 : index
    %c0_58 = arith.constant 0 : index
    %149 = vector.load %arg12[%c0_57, %c0_58] : memref<32x64xbf16, #tpu.memory_space<vmem>>, vector<32x64xbf16>
    %cst_59 = arith.constant dense<0.000000e+00> : vector<8x64xf32>
    %150 = tpu.matmul %148, %149, %cst_59 {dimension_numbers = #tpu.dot_dimension_numbers<[1], [0], [0], [1], [0, 0, 1, 1], [], []>} : vector<8x32xbf16>, vector<32x64xbf16>, vector<8x64xf32> -> vector<8x64xf32>
    %c0_60 = arith.constant 0 : index
    %c0_61 = arith.constant 0 : index
    %151 = vector.load %arg13[%c0_60, %c0_61] : memref<1x64xf32, #tpu.memory_space<vmem>>, vector<1x64xf32>
    %152 = vector.broadcast %151 : vector<1x64xf32> to vector<8x64xf32>
    %153 = arith.addf %150, %152 : vector<8x64xf32>
    %154 = arith.negf %153 : vector<8x64xf32>
    %155 = math.exp %154 : vector<8x64xf32>
    %cst_62 = arith.constant 1.000000e+00 : f32
    %156 = vector.broadcast %cst_62 : f32 to vector<8x64xf32>
    %157 = arith.addf %156, %155 : vector<8x64xf32>
    %158 = arith.divf %156, %157 : vector<8x64xf32>
    %159 = arith.mulf %153, %158 : vector<8x64xf32>
    %160 = arith.truncf %159 : vector<8x64xf32> to vector<8x64xbf16>
    %c0_63 = arith.constant 0 : index
    %c0_64 = arith.constant 0 : index
    %161 = vector.load %arg14[%c0_63, %c0_64] : memref<64x32xbf16, #tpu.memory_space<vmem>>, vector<64x32xbf16>
    %cst_65 = arith.constant dense<0.000000e+00> : vector<8x32xf32>
    %162 = tpu.matmul %160, %161, %cst_65 {dimension_numbers = #tpu.dot_dimension_numbers<[1], [0], [0], [1], [0, 0, 1, 1], [], []>} : vector<8x64xbf16>, vector<64x32xbf16>, vector<8x32xf32> -> vector<8x32xf32>
    %c0_66 = arith.constant 0 : index
    %c0_67 = arith.constant 0 : index
    %163 = vector.load %arg15[%c0_66, %c0_67] : memref<1x32xf32, #tpu.memory_space<vmem>>, vector<1x32xf32>
    %164 = vector.broadcast %163 : vector<1x32xf32> to vector<8x32xf32>
    %165 = arith.addf %162, %164 : vector<8x32xf32>
    %166 = arith.addf %123, %165 : vector<8x32xf32>
    %c0_68 = arith.constant 0 : index
    %c0_69 = arith.constant 0 : index
    %c0_70 = arith.constant 0 : index
    %167 = vector.load %arg16[%c0_68, %c0_69, %c0_70] : memref<1x8x32xf32, #tpu.memory_space<vmem>>, vector<1x8x32xf32>
    %168 = vector.shape_cast %167 : vector<1x8x32xf32> to vector<8x32xf32>
    %169 = vector.shape_cast %166 : vector<8x32xf32> to vector<1x8x32xf32>
    tpu.vector_store %arg16[%c0_68, %c0_69, %c0_70], %169 {strides = array<i32>} : memref<1x8x32xf32, #tpu.memory_space<vmem>>, vector<1x8x32xf32>,
    return
  }
  func.func @transform_0(%arg0: i32, %arg1: i32) -> (i32, i32, i32) {
    %c0_i32 = arith.constant 0 : i32
    %c0_i32_0 = arith.constant 0 : i32
    return %arg0, %arg1, %c0_i32 : i32, i32, i32
  }
  func.func @transform_1(%arg0: i32, %arg1: i32) -> (i32, i32) {
    %c0_i32 = arith.constant 0 : i32
    %c0_i32_0 = arith.constant 0 : i32
    %c0_i32_1 = arith.constant 0 : i32
    return %c0_i32, %c0_i32_0 : i32, i32
  }
  func.func @transform_2(%arg0: i32, %arg1: i32) -> (i32, i32) {
    %c0_i32 = arith.constant 0 : i32
    %c0_i32_0 = arith.constant 0 : i32
    %c0_i32_1 = arith.constant 0 : i32
    return %c0_i32, %c0_i32_0 : i32, i32
  }
  func.func @transform_3(%arg0: i32, %arg1: i32) -> (i32, i32) {
    %c0_i32 = arith.constant 0 : i32
    %c0_i32_0 = arith.constant 0 : i32
    %c0_i32_1 = arith.constant 0 : i32
    return %c0_i32, %c0_i32_0 : i32, i32
  }
  func.func @transform_4(%arg0: i32, %arg1: i32) -> (i32, i32) {
    %c0_i32 = arith.constant 0 : i32
    %c0_i32_0 = arith.constant 0 : i32
    %c0_i32_1 = arith.constant 0 : i32
    return %c0_i32, %c0_i32_0 : i32, i32
  }
  func.func @transform_5(%arg0: i32, %arg1: i32) -> (i32, i32) {
    %c0_i32 = arith.constant 0 : i32
    %c0_i32_0 = arith.constant 0 : i32
    %c0_i32_1 = arith.constant 0 : i32
    return %c0_i32, %c0_i32_0 : i32, i32
  }
  func.func @transform_6(%arg0: i32, %arg1: i32) -> (i32, i32) {
    %c0_i32 = arith.constant 0 : i32
    %c0_i32_0 = arith.constant 0 : i32
    %c0_i32_1 = arith.constant 0 : i32
    return %c0_i32, %c0_i32_0 : i32, i32
  }
  func.func @transform_7(%arg0: i32, %arg1: i32) -> (i32, i32) {
    %c0_i32 = arith.constant 0 : i32
    %c0_i32_0 = arith.constant 0 : i32
    %c0_i32_1 = arith.constant 0 : i32
    return %c0_i32, %c0_i32_0 : i32, i32
  }
  func.func @transform_8(%arg0: i32, %arg1: i32) -> (i32, i32) {
    %c0_i32 = arith.constant 0 : i32
    %c0_i32_0 = arith.constant 0 : i32
    %c0_i32_1 = arith.constant 0 : i32
    return %c0_i32, %c0_i32_0 : i32, i32
  }
  func.func @transform_9(%arg0: i32, %arg1: i32) -> (i32, i32) {
    %c0_i32 = arith.constant 0 : i32
    %c0_i32_0 = arith.constant 0 : i32
    %c0_i32_1 = arith.constant 0 : i32
    return %c0_i32, %c0_i32_0 : i32, i32
  }
  func.func @transform_10(%arg0: i32, %arg1: i32) -> (i32, i32) {
    %c0_i32 = arith.constant 0 : i32
    %c0_i32_0 = arith.constant 0 : i32
    %c0_i32_1 = arith.constant 0 : i32
    return %c0_i32, %c0_i32_0 : i32, i32
  }
  func.func @transform_11(%arg0: i32, %arg1: i32) -> (i32, i32) {
    %c0_i32 = arith.constant 0 : i32
    %c0_i32_0 = arith.constant 0 : i32
    %c0_i32_1 = arith.constant 0 : i32
    return %c0_i32, %c0_i32_0 : i32, i32
  }
  func.func @transform_12(%arg0: i32, %arg1: i32) -> (i32, i32) {
    %c0_i32 = arith.constant 0 : i32
    %c0_i32_0 = arith.constant 0 : i32
    %c0_i32_1 = arith.constant 0 : i32
    return %c0_i32, %c0_i32_0 : i32, i32
  }
  func.func @transform_13(%arg0: i32, %arg1: i32) -> (i32, i32) {
    %c0_i32 = arith.constant 0 : i32
    %c0_i32_0 = arith.constant 0 : i32
    %c0_i32_1 = arith.constant 0 : i32
    return %c0_i32, %c0_i32_0 : i32, i32
  }
  func.func @transform_14(%arg0: i32, %arg1: i32) -> (i32, i32, i32) {
    %c0_i32 = arith.constant 0 : i32
    %c0_i32_0 = arith.constant 0 : i32
    return %arg0, %arg1, %c0_i32 : i32, i32, i32
  }
}

</mosaic_0001>

<llo_original>
// kernel: tpu_custom_call.1
$region0: #{tpu_custom_call.1}
  #allocation0 [shape = 'u32[]', space=smem, size = 0x4, offset = 0x4, fixed_abs, tag = 'smem constant byte address 0x4 - core index']
  #allocation1 [shape = 'u32[72,128]{1,0:T(1,128)}', space=vmem, size = 0x9000, scoped, tag = 'internal scratch']
  %s0 = inlined_call_operand.vmem [shape: f32[2,8,32], index: 0, kind: input, shape index: {}]
  %s1 = inlined_call_operand.hbm [shape: f32[1,32], index: 1, kind: input, shape index: {}]
  %s2 = inlined_call_operand.vmem [shape: f32[1,32], index: 2, kind: input, shape index: {}]
  %s3 = inlined_call_operand.vmem [shape: bf16[32,32], index: 3, kind: input, shape index: {}]
  %s4 = inlined_call_operand.vmem [shape: bf16[32,32], index: 4, kind: input, shape index: {}]
  %s5 = inlined_call_operand.hbm [shape: bf16[32,32], index: 5, kind: input, shape index: {}]
  %s6 = inlined_call_operand.hbm [shape: bf16[32,32], index: 6, kind: input, shape index: {}]
  %s7 = inlined_call_operand.vmem [shape: f32[1,32], index: 7, kind: input, shape index: {}]
  %s8 = inlined_call_operand.vmem [shape: f32[1,32], index: 8, kind: input, shape index: {}]
  %s9 = inlined_call_operand.vmem [shape: f32[1,32], index: 9, kind: input, shape index: {}]
  %s10 = inlined_call_operand.hbm [shape: bf16[32,64], index: 10, kind: input, shape index: {}]
  %s11 = inlined_call_operand.vmem [shape: f32[1,64], index: 11, kind: input, shape index: {}]
  %s12 = inlined_call_operand.vmem [shape: bf16[64,32], index: 12, kind: input, shape index: {}]
  %s13 = inlined_call_operand.vmem [shape: f32[1,32], index: 13, kind: input, shape index: {}]
  %s14 = inlined_call_operand.hbm [shape: f32[2,8,32], index: 14, kind: output, shape index: {}]
  %s15 = sld [smem:[#allocation0]]
  $region105: #{tpu_custom_call.1} parent=0
    _
  %s17 = ssub.s32 1, %s15
  %s18 = scalar_select 0, %s17, %s15
  $region1: #{tpu_custom_call.1} parent=0
    #allocation2 [shape = 'u8[512]{0}', space=vmem, size = 0x400, scoped, tag = 'input window, operand 1, single buffered']
    #allocation3 [shape = 's32[2]{0}', space=sflag, size = 0x8, scoped, tag = 'scoped memory for tpu_custom_call.1']
    #allocation4 [shape = 's32[2]{0}', space=sflag, size = 0x8, scoped, tag = 'scoped memory for tpu_custom_call.1']
    #allocation5 [shape = 'u8[8192]{0}', space=vmem, size = 0x2000, scoped, tag = 'input window, operand 5, single buffered']
    #allocation6 [shape = 's32[1]{0}', space=sflag, size = 0x4, scoped, tag = 'scoped memory for tpu_custom_call.1']
    #allocation7 [shape = 'u8[8192]{0}', space=vmem, size = 0x2000, scoped, tag = 'input window, operand 6, single buffered']
    #allocation8 [shape = 'u8[8192]{0}', space=vmem, size = 0x2000, scoped, tag = 'input window, operand 10, single buffered']
    #allocation9 [shape = 's32[1]{0}', space=sflag, size = 0x4, scoped, tag = 'scoped memory for tpu_custom_call.1']
    #allocation10 [shape = 'u8[8192]{0}', space=vmem, size = 0x2000, scoped, tag = 'output window, operand 0']
    %19 = vsyncpa [#allocation3], 0
    %20 = vsyncpa [#allocation6], 0
    %21 = vsyncpa [#allocation9], 0
    %22 = vsyncpa [#allocation4], 0
    %s23 = scalar_lea.sflag [#allocation4], 1
    %24 = vsyncpa %s23, 0
    loop: start=0, step=1, limit=4
    $region2: #{tpu_custom_call.1} parent=1 // loop_pre_header
      _
    $region3: #{tpu_custom_call.1} parent=1 // loop_header
      %s26 = sphi 0, %s30
      %p27 = scmp.ge.s32.totalorder %s26, 4
      %s33 = sphi 0, %s45
      %s34 = sphi 0, %s41
      %s35 = sphi 0, %s33
      %s36 = sphi 0, %s34
      %s37 = sphi 0, %s35
      %s38 = sphi 0, %s36
      %s50 = sphi 0, %s52
      %s53 = sphi 0, %s50
      %s54 = sphi 0, %s53
      %s70 = sphi 0, %s54
      %s74 = sphi 0, %s74
      %s76 = sphi 0, %s74
      %s77 = sphi 0, %s76
      %s91 = sphi 0, %s77
      %s95 = sphi 0, %s95
      %s97 = sphi 0, %s95
      %s98 = sphi 0, %s97
      %s112 = sphi 0, %s98
      %s116 = sphi 0, %s116
      %s118 = sphi 0, %s116
      %s119 = sphi 0, %s118
      %s133 = sphi 0, %s119
      %s137 = sphi 0, %s137
      %s139 = sphi 0, %s137
      %s140 = sphi 0, %s139
      %s154 = sphi 0, %s140
      %s158 = sphi 0, %s158
      %s160 = sphi 0, %s158
      %s161 = sphi 0, %s160
      %s175 = sphi 0, %s161
      %s179 = sphi 0, %s179
      %s181 = sphi 0, %s179
      %s182 = sphi 0, %s181
      %s196 = sphi 0, %s182
      %s200 = sphi 0, %s200
      %s202 = sphi 0, %s200
      %s203 = sphi 0, %s202
      %s217 = sphi 0, %s203
      %s221 = sphi 0, %s221
      %s223 = sphi 0, %s221
      %s224 = sphi 0, %s223
      %s238 = sphi 0, %s224
      %s242 = sphi 0, %s242
      %s244 = sphi 0, %s242
      %s245 = sphi 0, %s244
      %s259 = sphi 0, %s245
      %s263 = sphi 0, %s263
      %s265 = sphi 0, %s263
      %s266 = sphi 0, %s265
      %s280 = sphi 0, %s266
      %s284 = sphi 0, %s284
      %s286 = sphi 0, %s284
      %s287 = sphi 0, %s286
      %s301 = sphi 0, %s287
      %s305 = sphi 0, %s305
      %s307 = sphi 0, %s305
      %s308 = sphi 0, %s307
      %s322 = sphi 0, %s308
      %s326 = sphi 0, %s326
      %s328 = sphi 0, %s326
      %s329 = sphi 0, %s328
      %s343 = sphi 0, %s329
      %s351 = sphi 0, %s353
      %s354 = sphi 0, %s351
      %s355 = sphi 0, %s354
      %s371 = sphi 0, %s355
    $region4: #{tpu_custom_call.1} parent=1 // loop_header_branch
      %29 = sbr.rel (%p27) target = $region8
    $region5: #{tpu_custom_call.1} parent=1 // loop_body
      %s31 = ssub.s32 %s26, 1
      %s32 = ssub.s32 %s26, 2
      %s39 = sadd.s32 1, %s34
      %p40 = scmp.ge.s32.totalorder %s39, 1
      %s41 = scalar_select %p40, 0, %s39
      %s42 = sadd.s32 1, %s33
      %s43 = scalar_select %p40, %s42, %s33
      %p44 = scmp.ge.s32.totalorder %s43, 2
      %s45 = scalar_select %p44, 0, %s43
      %s46 = ssub.s32 %s33, %s45
      %s47 = ssub.s32 %s34, %s41
      %s48 = sor.u32 %s46, %s47
      %p49 = scmp.eq.s32.totalorder %s48, 0
      %s51 = sadd.s32 %s50, 1
      %s52 = scalar_select %p49, %s50, %s51
      %p55 = pneg %p49
      %p56 = scmp.eq.s32.totalorder %s26, 1
      %p57 = por %p55, %p56
      %p58 = scmp.ne.s32.totalorder %s50, %s53
      %p59 = scmp.eq.s32.totalorder %s26, 0
      %p60 = por %p58, %p59
      %p61 = scmp.ne.s32.totalorder %s50, %s53
      %p62 = scmp.eq.s32.totalorder %s31, 1
      %p63 = por %p61, %p62
      %p64 = scmp.ne.s32.totalorder %s53, %s54
      %p65 = scmp.eq.s32.totalorder %s31, 0
      %p66 = por %p64, %p65
      %p67 = scmp.ne.s32.totalorder %s53, %s54
      %p68 = scmp.eq.s32.totalorder %s32, 1
      %p69 = por %p67, %p68
      %p71 = scmp.ne.s32.totalorder %s54, %s70
      %p72 = scmp.eq.s32.totalorder %s32, 0
      %p73 = por %p71, %p72
      %s75 = sadd.s32 %s74, 1
      %p78 = scmp.eq.s32.totalorder %s26, 1
      %p79 = scmp.ne.s32.totalorder %s74, %s76
      %p80 = scmp.eq.s32.totalorder %s26, 0
      %p81 = por %p79, %p80
      %p82 = scmp.ne.s32.totalorder %s74, %s76
      %p83 = scmp.eq.s32.totalorder %s31, 1
      %p84 = por %p82, %p83
      %p85 = scmp.ne.s32.totalorder %s76, %s77
      %p86 = scmp.eq.s32.totalorder %s31, 0
      %p87 = por %p85, %p86
      %p88 = scmp.ne.s32.totalorder %s76, %s77
      %p89 = scmp.eq.s32.totalorder %s32, 1
      %p90 = por %p88, %p89
      %p92 = scmp.ne.s32.totalorder %s77, %s91
      %p93 = scmp.eq.s32.totalorder %s32, 0
      %p94 = por %p92, %p93
      %s96 = sadd.s32 %s95, 1
      %p99 = scmp.eq.s32.totalorder %s26, 1
      %p100 = scmp.ne.s32.totalorder %s95, %s97
      %p101 = scmp.eq.s32.totalorder %s26, 0
      %p102 = por %p100, %p101
      %p103 = scmp.ne.s32.totalorder %s95, %s97
      %p104 = scmp.eq.s32.totalorder %s31, 1
      %p105 = por %p103, %p104
      %p106 = scmp.ne.s32.totalorder %s97, %s98
      %p107 = scmp.eq.s32.totalorder %s31, 0
      %p108 = por %p106, %p107
      %p109 = scmp.ne.s32.totalorder %s97, %s98
      %p110 = scmp.eq.s32.totalorder %s32, 1
      %p111 = por %p109, %p110
      %p113 = scmp.ne.s32.totalorder %s98, %s112
      %p114 = scmp.eq.s32.totalorder %s32, 0
      %p115 = por %p113, %p114
      %s117 = sadd.s32 %s116, 1
      %p120 = scmp.eq.s32.totalorder %s26, 1
      %p121 = scmp.ne.s32.totalorder %s116, %s118
      %p122 = scmp.eq.s32.totalorder %s26, 0
      %p123 = por %p121, %p122
      %p124 = scmp.ne.s32.totalorder %s116, %s118
      %p125 = scmp.eq.s32.totalorder %s31, 1
      %p126 = por %p124, %p125
      %p127 = scmp.ne.s32.totalorder %s118, %s119
      %p128 = scmp.eq.s32.totalorder %s31, 0
      %p129 = por %p127, %p128
      %p130 = scmp.ne.s32.totalorder %s118, %s119
      %p131 = scmp.eq.s32.totalorder %s32, 1
      %p132 = por %p130, %p131
      %p134 = scmp.ne.s32.totalorder %s119, %s133
      %p135 = scmp.eq.s32.totalorder %s32, 0
      %p136 = por %p134, %p135
      %s138 = sadd.s32 %s137, 1
      %p141 = scmp.eq.s32.totalorder %s26, 1
      %p142 = scmp.ne.s32.totalorder %s137, %s139
      %p143 = scmp.eq.s32.totalorder %s26, 0
      %p144 = por %p142, %p143
      %p145 = scmp.ne.s32.totalorder %s137, %s139
      %p146 = scmp.eq.s32.totalorder %s31, 1
      %p147 = por %p145, %p146
      %p148 = scmp.ne.s32.totalorder %s139, %s140
      %p149 = scmp.eq.s32.totalorder %s31, 0
      %p150 = por %p148, %p149
      %p151 = scmp.ne.s32.totalorder %s139, %s140
      %p152 = scmp.eq.s32.totalorder %s32, 1
      %p153 = por %p151, %p152
      %p155 = scmp.ne.s32.totalorder %s140, %s154
      %p156 = scmp.eq.s32.totalorder %s32, 0
      %p157 = por %p155, %p156
      %s159 = sadd.s32 %s158, 1
      %p162 = scmp.eq.s32.totalorder %s26, 1
      %p163 = scmp.ne.s32.totalorder %s158, %s160
      %p164 = scmp.eq.s32.totalorder %s26, 0
      %p165 = por %p163, %p164
      %p166 = scmp.ne.s32.totalorder %s158, %s160
      %p167 = scmp.eq.s32.totalorder %s31, 1
      %p168 = por %p166, %p167
      %p169 = scmp.ne.s32.totalorder %s160, %s161
      %p170 = scmp.eq.s32.totalorder %s31, 0
      %p171 = por %p169, %p170
      %p172 = scmp.ne.s32.totalorder %s160, %s161
      %p173 = scmp.eq.s32.totalorder %s32, 1
      %p174 = por %p172, %p173
      %p176 = scmp.ne.s32.totalorder %s161, %s175
      %p177 = scmp.eq.s32.totalorder %s32, 0
      %p178 = por %p176, %p177
      %s180 = sadd.s32 %s179, 1
      %p183 = scmp.eq.s32.totalorder %s26, 1
      %p184 = scmp.ne.s32.totalorder %s179, %s181
      %p185 = scmp.eq.s32.totalorder %s26, 0
      %p186 = por %p184, %p185
      %p187 = scmp.ne.s32.totalorder %s179, %s181
      %p188 = scmp.eq.s32.totalorder %s31, 1
      %p189 = por %p187, %p188
      %p190 = scmp.ne.s32.totalorder %s181, %s182
      %p191 = scmp.eq.s32.totalorder %s31, 0
      %p192 = por %p190, %p191
      %p193 = scmp.ne.s32.totalorder %s181, %s182
      %p194 = scmp.eq.s32.totalorder %s32, 1
      %p195 = por %p193, %p194
      %p197 = scmp.ne.s32.totalorder %s182, %s196
      %p198 = scmp.eq.s32.totalorder %s32, 0
      %p199 = por %p197, %p198
      %s201 = sadd.s32 %s200, 1
      %p204 = scmp.eq.s32.totalorder %s26, 1
      %p205 = scmp.ne.s32.totalorder %s200, %s202
      %p206 = scmp.eq.s32.totalorder %s26, 0
      %p207 = por %p205, %p206
      %p208 = scmp.ne.s32.totalorder %s200, %s202
      %p209 = scmp.eq.s32.totalorder %s31, 1
      %p210 = por %p208, %p209
      %p211 = scmp.ne.s32.totalorder %s202, %s203
      %p212 = scmp.eq.s32.totalorder %s31, 0
      %p213 = por %p211, %p212
      %p214 = scmp.ne.s32.totalorder %s202, %s203
      %p215 = scmp.eq.s32.totalorder %s32, 1
      %p216 = por %p214, %p215
      %p218 = scmp.ne.s32.totalorder %s203, %s217
      %p219 = scmp.eq.s32.totalorder %s32, 0
      %p220 = por %p218, %p219
      %s222 = sadd.s32 %s221, 1
      %p225 = scmp.eq.s32.totalorder %s26, 1
      %p226 = scmp.ne.s32.totalorder %s221, %s223
      %p227 = scmp.eq.s32.totalorder %s26, 0
      %p228 = por %p226, %p227
      %p229 = scmp.ne.s32.totalorder %s221, %s223
      %p230 = scmp.eq.s32.totalorder %s31, 1
      %p231 = por %p229, %p230
      %p232 = scmp.ne.s32.totalorder %s223, %s224
      %p233 = scmp.eq.s32.totalorder %s31, 0
      %p234 = por %p232, %p233
      %p235 = scmp.ne.s32.totalorder %s223, %s224
      %p236 = scmp.eq.s32.totalorder %s32, 1
      %p237 = por %p235, %p236
      %p239 = scmp.ne.s32.totalorder %s224, %s238
      %p240 = scmp.eq.s32.totalorder %s32, 0
      %p241 = por %p239, %p240
      %s243 = sadd.s32 %s242, 1
      %p246 = scmp.eq.s32.totalorder %s26, 1
      %p247 = scmp.ne.s32.totalorder %s242, %s244
      %p248 = scmp.eq.s32.totalorder %s26, 0
      %p249 = por %p247, %p248
      %p250 = scmp.ne.s32.totalorder %s242, %s244
      %p251 = scmp.eq.s32.totalorder %s31, 1
      %p252 = por %p250, %p251
      %p253 = scmp.ne.s32.totalorder %s244, %s245
      %p254 = scmp.eq.s32.totalorder %s31, 0
      %p255 = por %p253, %p254
      %p256 = scmp.ne.s32.totalorder %s244, %s245
      %p257 = scmp.eq.s32.totalorder %s32, 1
      %p258 = por %p256, %p257
      %p260 = scmp.ne.s32.totalorder %s245, %s259
      %p261 = scmp.eq.s32.totalorder %s32, 0
      %p262 = por %p260, %p261
      %s264 = sadd.s32 %s263, 1
      %p267 = scmp.eq.s32.totalorder %s26, 1
      %p268 = scmp.ne.s32.totalorder %s263, %s265
      %p269 = scmp.eq.s32.totalorder %s26, 0
      %p270 = por %p268, %p269
      %p271 = scmp.ne.s32.totalorder %s263, %s265
      %p272 = scmp.eq.s32.totalorder %s31, 1
      %p273 = por %p271, %p272
      %p274 = scmp.ne.s32.totalorder %s265, %s266
      %p275 = scmp.eq.s32.totalorder %s31, 0
      %p276 = por %p274, %p275
      %p277 = scmp.ne.s32.totalorder %s265, %s266
      %p278 = scmp.eq.s32.totalorder %s32, 1
      %p279 = por %p277, %p278
      %p281 = scmp.ne.s32.totalorder %s266, %s280
      %p282 = scmp.eq.s32.totalorder %s32, 0
      %p283 = por %p281, %p282
      %s285 = sadd.s32 %s284, 1
      %p288 = scmp.eq.s32.totalorder %s26, 1
      %p289 = scmp.ne.s32.totalorder %s284, %s286
      %p290 = scmp.eq.s32.totalorder %s26, 0
      %p291 = por %p289, %p290
      %p292 = scmp.ne.s32.totalorder %s284, %s286
      %p293 = scmp.eq.s32.totalorder %s31, 1
      %p294 = por %p292, %p293
      %p295 = scmp.ne.s32.totalorder %s286, %s287
      %p296 = scmp.eq.s32.totalorder %s31, 0
      %p297 = por %p295, %p296
      %p298 = scmp.ne.s32.totalorder %s286, %s287
      %p299 = scmp.eq.s32.totalorder %s32, 1
      %p300 = por %p298, %p299
      %p302 = scmp.ne.s32.totalorder %s287, %s301
      %p303 = scmp.eq.s32.totalorder %s32, 0
      %p304 = por %p302, %p303
      %s306 = sadd.s32 %s305, 1
      %p309 = scmp.eq.s32.totalorder %s26, 1
      %p310 = scmp.ne.s32.totalorder %s305, %s307
      %p311 = scmp.eq.s32.totalorder %s26, 0
      %p312 = por %p310, %p311
      %p313 = scmp.ne.s32.totalorder %s305, %s307
      %p314 = scmp.eq.s32.totalorder %s31, 1
      %p315 = por %p313, %p314
      %p316 = scmp.ne.s32.totalorder %s307, %s308
      %p317 = scmp.eq.s32.totalorder %s31, 0
      %p318 = por %p316, %p317
      %p319 = scmp.ne.s32.totalorder %s307, %s308
      %p320 = scmp.eq.s32.totalorder %s32, 1
      %p321 = por %p319, %p320
      %p323 = scmp.ne.s32.totalorder %s308, %s322
      %p324 = scmp.eq.s32.totalorder %s32, 0
      %p325 = por %p323, %p324
      %s327 = sadd.s32 %s326, 1
      %p330 = scmp.eq.s32.totalorder %s26, 1
      %p331 = scmp.ne.s32.totalorder %s326, %s328
      %p332 = scmp.eq.s32.totalorder %s26, 0
      %p333 = por %p331, %p332
      %p334 = scmp.ne.s32.totalorder %s326, %s328
      %p335 = scmp.eq.s32.totalorder %s31, 1
      %p336 = por %p334, %p335
      %p337 = scmp.ne.s32.totalorder %s328, %s329
      %p338 = scmp.eq.s32.totalorder %s31, 0
      %p339 = por %p337, %p338
      %p340 = scmp.ne.s32.totalorder %s328, %s329
      %p341 = scmp.eq.s32.totalorder %s32, 1
      %p342 = por %p340, %p341
      %p344 = scmp.ne.s32.totalorder %s329, %s343
      %p345 = scmp.eq.s32.totalorder %s32, 0
      %p346 = por %p344, %p345
      %s347 = ssub.s32 %s33, %s45
      %s348 = ssub.s32 %s34, %s41
      %s349 = sor.u32 %s347, %s348
      %p350 = scmp.eq.s32.totalorder %s349, 0
      %s352 = sadd.s32 %s351, 1
      %s353 = scalar_select %p350, %s351, %s352
      %p356 = pneg %p350
      %p357 = scmp.eq.s32.totalorder %s26, 1
      %p358 = por %p356, %p357
      %p359 = scmp.ne.s32.totalorder %s351, %s354
      %p360 = scmp.eq.s32.totalorder %s26, 0
      %p361 = por %p359, %p360
      %p362 = scmp.ne.s32.totalorder %s351, %s354
      %p363 = scmp.eq.s32.totalorder %s31, 1
      %p364 = por %p362, %p363
      %p365 = scmp.ne.s32.totalorder %s354, %s355
      %p366 = scmp.eq.s32.totalorder %s31, 0
      %p367 = por %p365, %p366
      %p368 = scmp.ne.s32.totalorder %s354, %s355
      %p369 = scmp.eq.s32.totalorder %s32, 1
      %p370 = por %p368, %p369
      %p372 = scmp.ne.s32.totalorder %s355, %s371
      %p373 = scmp.eq.s32.totalorder %s32, 0
      %p374 = por %p372, %p373
      %p375 = scmp.le.s32.totalorder 1, %s26
      %p376 = scmp.lt.s32.totalorder %s26, 3
      %p377 = pnand %p375, %p376
      %p378 = pneg %p377
      // Predicated region
      $region9: #{tpu_custom_call.1} parent=5 // pred_check
        _
      $region10: #{tpu_custom_call.1} parent=5 // pred_check_branch
        %380 = sbr.rel (%p377) target = $region12
      $region11: #{tpu_custom_call.1} parent=5 // pred_region
        %s381 = ssub.s32 %s26, 1
        // Predicated region
        $region13: #{tpu_custom_call.1} parent=11 // pred_check
          %p382 = pneg %p87
        $region14: #{tpu_custom_call.1} parent=11 // pred_check_branch
          %384 = sbr.rel (%p382) target = $region16
        $region15: #{tpu_custom_call.1} parent=11 // pred_region
          %386 = vsyncadd [#allocation3], 0
          %s388 = sshll.u32 %s1, 4
          %s389 = int_to_ptr.hbm [resolvable:$true] %s388
          %s390 = sshll.u32 [#allocation2], 4
          %s391 = int_to_ptr.vmem [resolvable:$true] %s390
          %393 = dma.hbm_to_vmem [thread:$0]  %s389, 16, %s391, [#allocation3]
        $region16: #{tpu_custom_call.1} parent=11 // pred_fallthru
          _
        // Predicated region
        $region17: #{tpu_custom_call.1} parent=11 // pred_check
          %p394 = pneg %p108
        $region18: #{tpu_custom_call.1} parent=11 // pred_check_branch
          %396 = sbr.rel (%p394) target = $region20
        $region19: #{tpu_custom_call.1} parent=11 // pred_region
          _
        $region20: #{tpu_custom_call.1} parent=11 // pred_fallthru
          _
        // Predicated region
        $region21: #{tpu_custom_call.1} parent=11 // pred_check
          %p397 = pneg %p129
        $region22: #{tpu_custom_call.1} parent=11 // pred_check_branch
          %399 = sbr.rel (%p397) target = $region24
        $region23: #{tpu_custom_call.1} parent=11 // pred_region
          _
        $region24: #{tpu_custom_call.1} parent=11 // pred_fallthru
          _
        // Predicated region
        $region25: #{tpu_custom_call.1} parent=11 // pred_check
          %p400 = pneg %p150
        $region26: #{tpu_custom_call.1} parent=11 // pred_check_branch
          %402 = sbr.rel (%p400) target = $region28
        $region27: #{tpu_custom_call.1} parent=11 // pred_region
          _
        $region28: #{tpu_custom_call.1} parent=11 // pred_fallthru
          _
        // Predicated region
        $region29: #{tpu_custom_call.1} parent=11 // pred_check
          %p403 = pneg %p171
        $region30: #{tpu_custom_call.1} parent=11 // pred_check_branch
          %405 = sbr.rel (%p403) target = $region32
        $region31: #{tpu_custom_call.1} parent=11 // pred_region
          %407 = vsyncadd [#allocation6], 0
          %s408 = sshll.u32 %s5, 4
          %s409 = int_to_ptr.hbm [resolvable:$true] %s408
          %s410 = sshll.u32 [#allocation5], 4
          %s411 = int_to_ptr.vmem [resolvable:$true] %s410
          %416 = dma.hbm_to_vmem [thread:$0]  %s409, 256, %s411, [#allocation6], 64, 64, 4
        $region32: #{tpu_custom_call.1} parent=11 // pred_fallthru
          _
        // Predicated region
        $region33: #{tpu_custom_call.1} parent=11 // pred_check
          %p417 = pneg %p192
        $region34: #{tpu_custom_call.1} parent=11 // pred_check_branch
          %419 = sbr.rel (%p417) target = $region36
        $region35: #{tpu_custom_call.1} parent=11 // pred_region
          %421 = vsyncadd [#allocation6], 0
          %s422 = sshll.u32 %s6, 4
          %s423 = int_to_ptr.hbm [resolvable:$true] %s422
          %s424 = sshll.u32 [#allocation7], 4
          %s425 = int_to_ptr.vmem [resolvable:$true] %s424
          %430 = dma.hbm_to_vmem [thread:$0]  %s423, 256, %s425, [#allocation6], 64, 64, 4
        $region36: #{tpu_custom_call.1} parent=11 // pred_fallthru
          _
        // Predicated region
        $region37: #{tpu_custom_call.1} parent=11 // pred_check
          %p431 = pneg %p213
        $region38: #{tpu_custom_call.1} parent=11 // pred_check_branch
          %433 = sbr.rel (%p431) target = $region40
        $region39: #{tpu_custom_call.1} parent=11 // pred_region
          _
        $region40: #{tpu_custom_call.1} parent=11 // pred_fallthru
          _
        // Predicated region
        $region41: #{tpu_custom_call.1} parent=11 // pred_check
          %p434 = pneg %p234
        $region42: #{tpu_custom_call.1} parent=11 // pred_check_branch
          %436 = sbr.rel (%p434) target = $region44
        $region43: #{tpu_custom_call.1} parent=11 // pred_region
          _
        $region44: #{tpu_custom_call.1} parent=11 // pred_fallthru
          _
        // Predicated region
        $region45: #{tpu_custom_call.1} parent=11 // pred_check
          %p437 = pneg %p255
        $region46: #{tpu_custom_call.1} parent=11 // pred_check_branch
          %439 = sbr.rel (%p437) target = $region48
        $region47: #{tpu_custom_call.1} parent=11 // pred_region
          _
        $region48: #{tpu_custom_call.1} parent=11 // pred_fallthru
          _
        // Predicated region
        $region49: #{tpu_custom_call.1} parent=11 // pred_check
          %p440 = pneg %p276
        $region50: #{tpu_custom_call.1} parent=11 // pred_check_branch
          %442 = sbr.rel (%p440) target = $region52
        $region51: #{tpu_custom_call.1} parent=11 // pred_region
          %444 = vsyncadd [#allocation9], 0
          %s445 = sshll.u32 %s10, 4
          %s446 = int_to_ptr.hbm [resolvable:$true] %s445
          %s447 = sshll.u32 [#allocation8], 4
          %s448 = int_to_ptr.vmem [resolvable:$true] %s447
          %453 = dma.hbm_to_vmem [thread:$0]  %s446, 256, %s448, [#allocation9], 64, 64, 4
        $region52: #{tpu_custom_call.1} parent=11 // pred_fallthru
          _
        // Predicated region
        $region53: #{tpu_custom_call.1} parent=11 // pred_check
          %p454 = pneg %p297
        $region54: #{tpu_custom_call.1} parent=11 // pred_check_branch
          %456 = sbr.rel (%p454) target = $region56
        $region55: #{tpu_custom_call.1} parent=11 // pred_region
          _
        $region56: #{tpu_custom_call.1} parent=11 // pred_fallthru
          _
        // Predicated region
        $region57: #{tpu_custom_call.1} parent=11 // pred_check
          %p457 = pneg %p318
        $region58: #{tpu_custom_call.1} parent=11 // pred_check_branch
          %459 = sbr.rel (%p457) target = $region60
        $region59: #{tpu_custom_call.1} parent=11 // pred_region
          _
        $region60: #{tpu_custom_call.1} parent=11 // pred_fallthru
          _
        // Predicated region
        $region61: #{tpu_custom_call.1} parent=11 // pred_check
          %p460 = pneg %p339
        $region62: #{tpu_custom_call.1} parent=11 // pred_check_branch
          %462 = sbr.rel (%p460) target = $region64
        $region63: #{tpu_custom_call.1} parent=11 // pred_region
          _
        $region64: #{tpu_custom_call.1} parent=11 // pred_fallthru
          _
      $region12: #{tpu_custom_call.1} parent=5 // pred_fallthru
        _
      %p463 = scmp.lt.s32.totalorder %s26, 2
      // Predicated region
      $region65: #{tpu_custom_call.1} parent=5 // pred_check
        %p464 = pneg %p463
      $region66: #{tpu_custom_call.1} parent=5 // pred_check_branch
        %466 = sbr.rel (%p464) target = $region68
      $region67: #{tpu_custom_call.1} parent=5 // pred_region
        // Predicated region
        $region69: #{tpu_custom_call.1} parent=67 // pred_check
          %p467 = pneg %p60
        $region70: #{tpu_custom_call.1} parent=67 // pred_check_branch
          %469 = sbr.rel (%p467) target = $region72
        $region71: #{tpu_custom_call.1} parent=67 // pred_region
          %p470 = scmp.lt.s32.totalorder %s33, 1
          %s471 = scalar_select %p470, %s33, 1
          %p472 = scmp.lt.s32.totalorder %s34, 0
          %s473 = scalar_select %p472, %s34, 0
          %s474 = sadd.s32 %s473, %s471
          %s475 = smul.addr %s474, 8
          %s476 = scalar_lea.vmem %s0, %s475
        $region72: #{tpu_custom_call.1} parent=67 // pred_fallthru
          _
      $region68: #{tpu_custom_call.1} parent=5 // pred_fallthru
        _
      %p477 = scmp.le.s32.totalorder 1, %s26
      %p478 = scmp.lt.s32.totalorder %s26, 3
      %p479 = pnand %p477, %p478
      %p480 = pneg %p479
      // Predicated region
      $region73: #{tpu_custom_call.1} parent=5 // pred_check
        _
      $region74: #{tpu_custom_call.1} parent=5 // pred_check_branch
        %482 = sbr.rel (%p479) target = $region76
      $region75: #{tpu_custom_call.1} parent=5 // pred_region
        %s483 = ssub.s32 %s26, 1
        // Predicated region
        $region77: #{tpu_custom_call.1} parent=75 // pred_check
          %p484 = pneg %p87
        $region78: #{tpu_custom_call.1} parent=75 // pred_check_branch
          %486 = sbr.rel (%p484) target = $region80
        $region79: #{tpu_custom_call.1} parent=75 // pred_region
          %488 = dma.done [#allocation3], 16
        $region80: #{tpu_custom_call.1} parent=75 // pred_fallthru
          _
        // Predicated region
        $region81: #{tpu_custom_call.1} parent=75 // pred_check
          %p489 = pneg %p171
        $region82: #{tpu_custom_call.1} parent=75 // pred_check_branch
          %491 = sbr.rel (%p489) target = $region84
        $region83: #{tpu_custom_call.1} parent=75 // pred_region
          %493 = dma.done [#allocation6], 256
        $region84: #{tpu_custom_call.1} parent=75 // pred_fallthru
          _
        // Predicated region
        $region85: #{tpu_custom_call.1} parent=75 // pred_check
          %p494 = pneg %p192
        $region86: #{tpu_custom_call.1} parent=75 // pred_check_branch
          %496 = sbr.rel (%p494) target = $region88
        $region87: #{tpu_custom_call.1} parent=75 // pred_region
          %498 = dma.done [#allocation6], 256
        $region88: #{tpu_custom_call.1} parent=75 // pred_fallthru
          _
        // Predicated region
        $region89: #{tpu_custom_call.1} parent=75 // pred_check
          %p499 = pneg %p276
        $region90: #{tpu_custom_call.1} parent=75 // pred_check_branch
          %501 = sbr.rel (%p499) target = $region92
        $region91: #{tpu_custom_call.1} parent=75 // pred_region
          %503 = dma.done [#allocation9], 256
        $region92: #{tpu_custom_call.1} parent=75 // pred_fallthru
          _
        %p504 = scmp.lt.s32.totalorder %s35, 1
        %s505 = scalar_select %p504, %s35, 1
        %p506 = scmp.lt.s32.totalorder %s36, 0
        %s507 = scalar_select %p506, %s36, 0
        %s508 = sadd.s32 %s507, %s505
        %s509 = smul.addr %s508, 8
        %s510 = scalar_lea.vmem %s0, %s509
        %p511 = pneg %p66
        %p512 = pneg %p63
        %p513 = pneg %p87
        %p514 = pneg %p84
        %p515 = pneg %p108
        %p516 = pneg %p105
        %p517 = pneg %p129
        %p518 = pneg %p126
        %p519 = pneg %p150
        %p520 = pneg %p147
        %p521 = pneg %p171
        %p522 = pneg %p168
        %p523 = pneg %p192
        %p524 = pneg %p189
        %p525 = pneg %p213
        %p526 = pneg %p210
        %p527 = pneg %p234
        %p528 = pneg %p231
        %p529 = pneg %p255
        %p530 = pneg %p252
        %p531 = pneg %p276
        %p532 = pneg %p273
        %p533 = pneg %p297
        %p534 = pneg %p294
        %p535 = pneg %p318
        %p536 = pneg %p315
        %p537 = pneg %p339
        %p538 = pneg %p336
        %p539 = pneg %p367
        %p540 = pneg %p364
        %s541 = sand.u32 %s354, 1
        %s542 = scalar_lea.sflag [#allocation4], %s541
        %s543 = sand.u32 %s354, 1
        %s544 = smul.addr %s543, 8
        %s545 = scalar_lea.vmem [#allocation10], %s544
        %p546 = scmp.lt.s32.totalorder %s35, 1
        %s547 = scalar_select %p546, %s35, 1
        %p548 = scmp.lt.s32.totalorder %s36, 0
        %s549 = scalar_select %p548, %s36, 0
        %s550 = sadd.s32 %s549, %s547
        %s551 = smul.addr %s550, 8
        %s552 = scalar_lea.vmem %s0, %s551
        %v554 = vld [vmem:[%s552] sm:$0xff]
        %v555 = vld [vmem:[#allocation2] sm:$0x1]
        %v556 = vld [vmem:[%s2] sm:$0x1]
        %vm557 = vcmask 261120
        %v558 = vsel %vm557, %v554, 0.0
        %559 = vadd.xlane.f32.xlu0 %v558
        %v560 = vpop.xlane.xlu0 %559
        %v561 = vrcp.pop 32.0
        %v562 = vmul.f32 32.0, %v561
        %v563 = vsub.f32 1.0, %v562
        %v564 = vmul.f32 %v561, %v563
        %v565 = vadd.f32 %v561, %v564
        %vm566 = vweird.f32 %v561
        %v567 = vsel %vm566, %v561, %v565
        %v568 = vmul.f32 %v560, %v567
        %v569 = vsub.f32 %v554, %v568
        %v570 = vmul.f32 %v569, %v569
        %v571 = vsel %vm557, %v570, 0.0
        %572 = vadd.xlane.f32.xlu0 %v571
        %v573 = vpop.xlane.xlu0 %572
        %v574 = vmul.f32 %v573, %v567
        %v575 = vadd.f32 %v574, 1e-05
        %v576 = vrsqrt.pop %v575
        %v577 = vmul.f32 %v576, %v575
        %v578 = vmul.f32 %v577, %v576
        %v579 = vmul.f32 0.5, %v578
        %v580 = vsub.f32 1.5, %v579
        %v581 = vmul.f32 %v576, %v580
        %vm582 = vweird.f32 %v575
        %vm583 = vweird.f32 %v576
        %vm584 = vmor %vm582, %vm583
        %v585 = vsel %vm584, %v576, %v581
        %v586 = vmul.f32 %v569, %v585
        %v588 = vperm.slane %v555, 0
        %v590 = vmul.f32 %v586, %v588
        %v592 = vperm.slane %v556, 0
        %v594 = vadd.f32 %v590, %v592
        %v595 = vpack.c.bf16 %v594, %v594
        %v596 = vld [vmem:[%s3] sm:$0xf]
        %v597 = vld [vmem:[%s3 + $0x4] sm:$0xf]
        %v598 = vld [vmem:[%s3 + $0x8] sm:$0xf]
        %v599 = vld [vmem:[%s3 + $0xc] sm:$0xf]
        %v604 = vunpack.c.l.b16 %v596
        %v605 = vunpack.c.l.b16 %v597
        %v606 = vunpack.c.l.b16 %v598
        %v607 = vunpack.c.l.b16 %v599
        %v608 = vpack.c.b16 %v605, %v604
        %v609 = vpack.c.b16 %v607, %v606
        %v613 = vsel %vm557, %v595, 0
        %615 = vmatpush.bf16.msra.mxu0 0
        %616 = vmatpush.bf16.msra.mxu0 0
        %617 = vmatpush.bf16.msra.mxu0 0
        %618 = vmatpush.bf16.msra.mxu0 0
        %619 = vmatpush.bf16.msra.mxu0 0
        %620 = vmatpush.bf16.msra.mxu0 0
        %621 = vmatpush.bf16.msra.mxu0 %v609
        %622 = vmatpush.bf16.msra.mxu0 %v608
        %623 = vmatmul.bf16.gmra.mxu0 %v613
        %v624 = vpop.f32.mrf.mxu0
        %v625 = vadd.f32 0.0, %v624
        %v626 = vpop.f32.mrf.mxu0
        %627 = vdwg.mxu0
        %v628 = vmul.f32 %v625, 0.17677669
        %v629 = vld [vmem:[%s4] sm:$0xf]
        %v630 = vld [vmem:[%s4 + $0x4] sm:$0xf]
        %v631 = vld [vmem:[%s4 + $0x8] sm:$0xf]
        %v632 = vld [vmem:[%s4 + $0xc] sm:$0xf]
        %v637 = vunpack.c.l.b16 %v629
        %v638 = vunpack.c.l.b16 %v630
        %v639 = vunpack.c.l.b16 %v631
        %v640 = vunpack.c.l.b16 %v632
        %v641 = vpack.c.b16 %v638, %v637
        %v642 = vpack.c.b16 %v640, %v639
        %645 = vmatpush.bf16.msra.mxu0 0
        %646 = vmatpush.bf16.msra.mxu0 0
        %647 = vmatpush.bf16.msra.mxu0 0
        %648 = vmatpush.bf16.msra.mxu0 0
        %649 = vmatpush.bf16.msra.mxu0 0
        %650 = vmatpush.bf16.msra.mxu0 0
        %651 = vmatpush.bf16.msra.mxu0 %v642
        %652 = vmatpush.bf16.msra.mxu0 %v641
        %653 = vmatmul.bf16.gmra.mxu0 %v613
        %v654 = vpop.f32.mrf.mxu0
        %v655 = vadd.f32 0.0, %v654
        %v656 = vpop.f32.mrf.mxu0
        %657 = vdwg.mxu0
        %v658 = vld [vmem:[#allocation5] sm:$0xf]
        %v659 = vld [vmem:[#allocation5 + $0x4] sm:$0xf]
        %v660 = vld [vmem:[#allocation5 + $0x8] sm:$0xf]
        %v661 = vld [vmem:[#allocation5 + $0xc] sm:$0xf]
        %v666 = vunpack.c.l.b16 %v658
        %v667 = vunpack.c.l.b16 %v659
        %v668 = vunpack.c.l.b16 %v660
        %v669 = vunpack.c.l.b16 %v661
        %v670 = vpack.c.b16 %v667, %v666
        %v671 = vpack.c.b16 %v669, %v668
        %674 = vmatpush.bf16.msra.mxu0 0
        %675 = vmatpush.bf16.msra.mxu0 0
        %676 = vmatpush.bf16.msra.mxu0 0
        %677 = vmatpush.bf16.msra.mxu0 0
        %678 = vmatpush.bf16.msra.mxu0 0
        %679 = vmatpush.bf16.msra.mxu0 0
        %680 = vmatpush.bf16.msra.mxu0 %v671
        %681 = vmatpush.bf16.msra.mxu0 %v670
        %682 = vmatmul.bf16.gmra.mxu0 %v613
        %v683 = vpop.f32.mrf.mxu0
        %v684 = vadd.f32 0.0, %v683
        %v685 = vpop.f32.mrf.mxu0
        %686 = vdwg.mxu0
        %v687 = vpack.c.bf16 %v628, %v628
        %v688 = vpack.c.bf16 %v655, %v655
        %v689 = vpack.c.bf16 %v684, %v684
        %vm690 = vcmask 64512
        %v692 = vsel %vm690, %v687, 0
        %v695 = vsel %vm690, %v688, 0
        %697 = vmatpush.bf16.xpose.msra.mxu0 0
        %698 = vmatpush.bf16.xpose.msra.mxu0 0
        %699 = vmatpush.bf16.xpose.msra.mxu0 0
        %700 = vmatpush.bf16.xpose.msra.mxu0 0
        %701 = vmatpush.bf16.xpose.msra.mxu0 0
        %702 = vmatpush.bf16.xpose.msra.mxu0 0
        %703 = vmatpush.bf16.xpose.msra.mxu0 0
        %704 = vmatpush.bf16.xpose.msra.mxu0 %v695
        %705 = vmatmul.bf16.gmra.mxu0 %v692
        %v706 = vpop.f32.mrf.mxu0
        %v707 = vadd.f32 0.0, %v706
        %v708 = vpop.f32.mrf.mxu0
        %709 = vdwg.mxu0
        %v710 = vsel %vm690, %v707, -inf
        %711 = vmax.xlane.f32.xlu0 %v710
        %v712 = vpop.xlane.xlu0 %711
        %v713 = vsub.f32 %v707, %v712
        %v714 = vmul.f32 %v713, 1.442695
        %v715 = vpow.pop %v714
        %v716 = vsel %vm690, %v715, 0.0
        %717 = vadd.xlane.f32.xlu0 %v716
        %v718 = vpop.xlane.xlu0 %717
        %v719 = vrcp.pop %v718
        %v720 = vmul.f32 %v715, %v719
        %v721 = vpack.c.bf16 %v720, %v720
        %v723 = vsel %vm690, %v721, 0
        %vm725 = vcmask 1043456
        %v727 = vsel %vm725, %v689, 0
        %729 = vmatpush.bf16.msra.mxu0 0
        %730 = vmatpush.bf16.msra.mxu0 0
        %731 = vmatpush.bf16.msra.mxu0 0
        %732 = vmatpush.bf16.msra.mxu0 0
        %733 = vmatpush.bf16.msra.mxu0 0
        %734 = vmatpush.bf16.msra.mxu0 0
        %735 = vmatpush.bf16.msra.mxu0 0
        %736 = vmatpush.bf16.msra.mxu0 %v727
        %737 = vmatmul.bf16.gmra.mxu0 %v723
        %v738 = vpop.f32.mrf.mxu0
        %v739 = vadd.f32 0.0, %v738
        %v740 = vpop.f32.mrf.mxu0
        %741 = vdwg.mxu0
        %v742 = vpack.c.bf16 %v739, %v739
        %v743 = vld [vmem:[#allocation7] sm:$0xf]
        %v745 = vunpack.c.l.b16 %v687
        %v746 = vpack.c.b16 %v745, %v745
        %747 = vrot.lane.b32.xlu0 %v746, 120
        %v748 = vpop.permute.xlu0 %747
        %v750 = vunpack.c.l.b16 %v688
        %v751 = vpack.c.b16 %v750, %v750
        %752 = vrot.lane.b32.xlu0 %v751, 120
        %v753 = vpop.permute.xlu0 %752
        %v755 = vsel %vm690, %v748, 0
        %v758 = vsel %vm690, %v753, 0
        %760 = vmatpush.bf16.xpose.msra.mxu0 0
        %761 = vmatpush.bf16.xpose.msra.mxu0 0
        %762 = vmatpush.bf16.xpose.msra.mxu0 0
        %763 = vmatpush.bf16.xpose.msra.mxu0 0
        %764 = vmatpush.bf16.xpose.msra.mxu0 0
        %765 = vmatpush.bf16.xpose.msra.mxu0 0
        %766 = vmatpush.bf16.xpose.msra.mxu0 0
        %767 = vmatpush.bf16.xpose.msra.mxu0 %v758
        %768 = vmatmul.bf16.gmra.mxu0 %v755
        %v769 = vpop.f32.mrf.mxu0
        %v770 = vadd.f32 0.0, %v769
        %v771 = vpop.f32.mrf.mxu0
        %772 = vdwg.mxu0
        %v773 = vsel %vm690, %v770, -inf
        %774 = vmax.xlane.f32.xlu0 %v773
        %v775 = vpop.xlane.xlu0 %774
        %v776 = vsub.f32 %v770, %v775
        %v777 = vmul.f32 %v776, 1.442695
        %v778 = vpow.pop %v777
        %v779 = vsel %vm690, %v778, 0.0
        %780 = vadd.xlane.f32.xlu0 %v779
        %v781 = vpop.xlane.xlu0 %780
        %v782 = vrcp.pop %v781
        %v783 = vmul.f32 %v778, %v782
        %v784 = vpack.c.bf16 %v783, %v783
        %v786 = vunpack.c.l.b16 %v689
        %v787 = vpack.c.b16 %v786, %v786
        %788 = vrot.lane.b32.xlu0 %v787, 120
        %v789 = vpop.permute.xlu0 %788
        %v791 = vsel %vm690, %v784, 0
        %v794 = vsel %vm725, %v789, 0
        %796 = vmatpush.bf16.msra.mxu0 0
        %797 = vmatpush.bf16.msra.mxu0 0
        %798 = vmatpush.bf16.msra.mxu0 0
        %799 = vmatpush.bf16.msra.mxu0 0
        %800 = vmatpush.bf16.msra.mxu0 0
        %801 = vmatpush.bf16.msra.mxu0 0
        %802 = vmatpush.bf16.msra.mxu0 0
        %803 = vmatpush.bf16.msra.mxu0 %v794
        %804 = vmatmul.bf16.gmra.mxu0 %v791
        %v805 = vpop.f32.mrf.mxu0
        %v806 = vadd.f32 0.0, %v805
        %v807 = vpop.f32.mrf.mxu0
        %808 = vdwg.mxu0
        %v809 = vpack.c.bf16 %v806, %v806
        %v810 = vld [vmem:[#allocation7 + $0x4] sm:$0xf]
        %v812 = vsel %vm690, %v809, 0
        %v815 = vsel %vm725, %v810, 0
        %817 = vmatpush.bf16.msra.mxu0 0
        %818 = vmatpush.bf16.msra.mxu0 0
        %819 = vmatpush.bf16.msra.mxu0 0
        %820 = vmatpush.bf16.msra.mxu0 0
        %821 = vmatpush.bf16.msra.mxu0 0
        %822 = vmatpush.bf16.msra.mxu0 0
        %823 = vmatpush.bf16.msra.mxu0 0
        %824 = vmatpush.bf16.msra.mxu0 %v815
        %825 = vmatmul.bf16.gmra.mxu0 %v812
        %v826 = vpop.f32.mrf.mxu0
        %v827 = vadd.f32 0.0, %v826
        %v828 = vpop.f32.mrf.mxu0
        %829 = vdwg.mxu0
        %v831 = vsel %vm690, %v742, 0
        %v834 = vsel %vm725, %v743, 0
        %836 = vmatpush.bf16.msra.mxu0 0
        %837 = vmatpush.bf16.msra.mxu0 0
        %838 = vmatpush.bf16.msra.mxu0 0
        %839 = vmatpush.bf16.msra.mxu0 0
        %840 = vmatpush.bf16.msra.mxu0 0
        %841 = vmatpush.bf16.msra.mxu0 0
        %842 = vmatpush.bf16.msra.mxu0 0
        %843 = vmatpush.bf16.msra.mxu0 %v834
        %844 = vmatmul.bf16.gmra.mxu0 %v831
        %v845 = vpop.f32.mrf.mxu0
        %v846 = vadd.f32 %v827, %v845
        %v847 = vpop.f32.mrf.mxu0
        %848 = vdwg.mxu0
        %849 = vrot.lane.b32.xlu0 %v746, 112
        %v850 = vpop.permute.xlu0 %849
        %851 = vrot.lane.b32.xlu0 %v751, 112
        %v852 = vpop.permute.xlu0 %851
        %v854 = vsel %vm690, %v850, 0
        %v857 = vsel %vm690, %v852, 0
        %859 = vmatpush.bf16.xpose.msra.mxu0 0
        %860 = vmatpush.bf16.xpose.msra.mxu0 0
        %861 = vmatpush.bf16.xpose.msra.mxu0 0
        %862 = vmatpush.bf16.xpose.msra.mxu0 0
        %863 = vmatpush.bf16.xpose.msra.mxu0 0
        %864 = vmatpush.bf16.xpose.msra.mxu0 0
        %865 = vmatpush.bf16.xpose.msra.mxu0 0
        %866 = vmatpush.bf16.xpose.msra.mxu0 %v857
        %867 = vmatmul.bf16.gmra.mxu0 %v854
        %v868 = vpop.f32.mrf.mxu0
        %v869 = vadd.f32 0.0, %v868
        %v870 = vpop.f32.mrf.mxu0
        %871 = vdwg.mxu0
        %v872 = vsel %vm690, %v869, -inf
        %873 = vmax.xlane.f32.xlu0 %v872
        %v874 = vpop.xlane.xlu0 %873
        %v875 = vsub.f32 %v869, %v874
        %v876 = vmul.f32 %v875, 1.442695
        %v877 = vpow.pop %v876
        %v878 = vsel %vm690, %v877, 0.0
        %879 = vadd.xlane.f32.xlu0 %v878
        %v880 = vpop.xlane.xlu0 %879
        %v881 = vrcp.pop %v880
        %v882 = vmul.f32 %v877, %v881
        %v883 = vpack.c.bf16 %v882, %v882
        %884 = vrot.lane.b32.xlu0 %v787, 112
        %v885 = vpop.permute.xlu0 %884
        %v887 = vsel %vm690, %v883, 0
        %v890 = vsel %vm725, %v885, 0
        %892 = vmatpush.bf16.msra.mxu0 0
        %893 = vmatpush.bf16.msra.mxu0 0
        %894 = vmatpush.bf16.msra.mxu0 0
        %895 = vmatpush.bf16.msra.mxu0 0
        %896 = vmatpush.bf16.msra.mxu0 0
        %897 = vmatpush.bf16.msra.mxu0 0
        %898 = vmatpush.bf16.msra.mxu0 0
        %899 = vmatpush.bf16.msra.mxu0 %v890
        %900 = vmatmul.bf16.gmra.mxu0 %v887
        %v901 = vpop.f32.mrf.mxu0
        %v902 = vadd.f32 0.0, %v901
        %v903 = vpop.f32.mrf.mxu0
        %904 = vdwg.mxu0
        %v905 = vpack.c.bf16 %v902, %v902
        %v906 = vld [vmem:[#allocation7 + $0x8] sm:$0xf]
        %v908 = vsel %vm690, %v905, 0
        %v911 = vsel %vm725, %v906, 0
        %913 = vmatpush.bf16.msra.mxu0 0
        %914 = vmatpush.bf16.msra.mxu0 0
        %915 = vmatpush.bf16.msra.mxu0 0
        %916 = vmatpush.bf16.msra.mxu0 0
        %917 = vmatpush.bf16.msra.mxu0 0
        %918 = vmatpush.bf16.msra.mxu0 0
        %919 = vmatpush.bf16.msra.mxu0 0
        %920 = vmatpush.bf16.msra.mxu0 %v911
        %921 = vmatmul.bf16.gmra.mxu0 %v908
        %v922 = vpop.f32.mrf.mxu0
        %v923 = vadd.f32 0.0, %v922
        %v924 = vpop.f32.mrf.mxu0
        %925 = vdwg.mxu0
        %v926 = vadd.f32 %v846, %v923
        %927 = vrot.lane.b32.xlu0 %v746, 104
        %v928 = vpop.permute.xlu0 %927
        %929 = vrot.lane.b32.xlu0 %v751, 104
        %v930 = vpop.permute.xlu0 %929
        %v932 = vsel %vm690, %v928, 0
        %v935 = vsel %vm690, %v930, 0
        %937 = vmatpush.bf16.xpose.msra.mxu0 0
        %938 = vmatpush.bf16.xpose.msra.mxu0 0
        %939 = vmatpush.bf16.xpose.msra.mxu0 0
        %940 = vmatpush.bf16.xpose.msra.mxu0 0
        %941 = vmatpush.bf16.xpose.msra.mxu0 0
        %942 = vmatpush.bf16.xpose.msra.mxu0 0
        %943 = vmatpush.bf16.xpose.msra.mxu0 0
        %944 = vmatpush.bf16.xpose.msra.mxu0 %v935
        %945 = vmatmul.bf16.gmra.mxu0 %v932
        %v946 = vpop.f32.mrf.mxu0
        %v947 = vadd.f32 0.0, %v946
        %v948 = vpop.f32.mrf.mxu0
        %949 = vdwg.mxu0
        %v950 = vsel %vm690, %v947, -inf
        %951 = vmax.xlane.f32.xlu0 %v950
        %v952 = vpop.xlane.xlu0 %951
        %v953 = vsub.f32 %v947, %v952
        %v954 = vmul.f32 %v953, 1.442695
        %v955 = vpow.pop %v954
        %v956 = vsel %vm690, %v955, 0.0
        %957 = vadd.xlane.f32.xlu0 %v956
        %v958 = vpop.xlane.xlu0 %957
        %v959 = vrcp.pop %v958
        %v960 = vmul.f32 %v955, %v959
        %v961 = vpack.c.bf16 %v960, %v960
        %962 = vrot.lane.b32.xlu0 %v787, 104
        %v963 = vpop.permute.xlu0 %962
        %v965 = vsel %vm690, %v961, 0
        %v968 = vsel %vm725, %v963, 0
        %970 = vmatpush.bf16.msra.mxu0 0
        %971 = vmatpush.bf16.msra.mxu0 0
        %972 = vmatpush.bf16.msra.mxu0 0
        %973 = vmatpush.bf16.msra.mxu0 0
        %974 = vmatpush.bf16.msra.mxu0 0
        %975 = vmatpush.bf16.msra.mxu0 0
        %976 = vmatpush.bf16.msra.mxu0 0
        %977 = vmatpush.bf16.msra.mxu0 %v968
        %978 = vmatmul.bf16.gmra.mxu0 %v965
        %v979 = vpop.f32.mrf.mxu0
        %v980 = vadd.f32 0.0, %v979
        %v981 = vpop.f32.mrf.mxu0
        %982 = vdwg.mxu0
        %v983 = vpack.c.bf16 %v980, %v980
        %v984 = vld [vmem:[#allocation7 + $0xc] sm:$0xf]
        %v986 = vsel %vm690, %v983, 0
        %v989 = vsel %vm725, %v984, 0
        %991 = vmatpush.bf16.msra.mxu0 0
        %992 = vmatpush.bf16.msra.mxu0 0
        %993 = vmatpush.bf16.msra.mxu0 0
        %994 = vmatpush.bf16.msra.mxu0 0
        %995 = vmatpush.bf16.msra.mxu0 0
        %996 = vmatpush.bf16.msra.mxu0 0
        %997 = vmatpush.bf16.msra.mxu0 0
        %998 = vmatpush.bf16.msra.mxu0 %v989
        %999 = vmatmul.bf16.gmra.mxu0 %v986
        %v1000 = vpop.f32.mrf.mxu0
        %v1001 = vadd.f32 0.0, %v1000
        %v1002 = vpop.f32.mrf.mxu0
        %1003 = vdwg.mxu0
        %v1004 = vadd.f32 %v926, %v1001
        %v1005 = vadd.f32 %v554, %v1004
        %v1006 = vld [vmem:[%s7] sm:$0x1]
        %v1008 = vperm.slane %v1006, 0
        %v1010 = vadd.f32 %v1005, %v1008
        %v1011 = vld [vmem:[%s8] sm:$0x1]
        %v1012 = vld [vmem:[%s9] sm:$0x1]
        %v1013 = vsel %vm557, %v1010, 0.0
        %1014 = vadd.xlane.f32.xlu0 %v1013
        %v1015 = vpop.xlane.xlu0 %1014
        %v1016 = vmul.f32 %v1015, %v567
        %v1017 = vsub.f32 %v1010, %v1016
        %v1018 = vmul.f32 %v1017, %v1017
        %v1019 = vsel %vm557, %v1018, 0.0
        %1020 = vadd.xlane.f32.xlu0 %v1019
        %v1021 = vpop.xlane.xlu0 %1020
        %v1022 = vmul.f32 %v1021, %v567
        %v1023 = vadd.f32 %v1022, 1e-05
        %v1024 = vrsqrt.pop %v1023
        %v1025 = vmul.f32 %v1024, %v1023
        %v1026 = vmul.f32 %v1025, %v1024
        %v1027 = vmul.f32 0.5, %v1026
        %v1028 = vsub.f32 1.5, %v1027
        %v1029 = vmul.f32 %v1024, %v1028
        %vm1030 = vweird.f32 %v1023
        %vm1031 = vweird.f32 %v1024
        %vm1032 = vmor %vm1030, %vm1031
        %v1033 = vsel %vm1032, %v1024, %v1029
        %v1034 = vmul.f32 %v1017, %v1033
        %v1036 = vperm.slane %v1011, 0
        %v1038 = vmul.f32 %v1034, %v1036
        %v1040 = vperm.slane %v1012, 0
        %v1042 = vadd.f32 %v1038, %v1040
        %v1043 = vpack.c.bf16 %v1042, %v1042
        %v1044 = vld [vmem:[#allocation8] sm:$0xf]
        %v1045 = vld [vmem:[#allocation8 + $0x4] sm:$0xf]
        %v1046 = vld [vmem:[#allocation8 + $0x8] sm:$0xf]
        %v1047 = vld [vmem:[#allocation8 + $0xc] sm:$0xf]
        %v1048 = vld [vmem:[%s11] sm:$0x1]
        %v1050 = vperm.slane %v1048, 0
        %v1056 = vunpack.c.l.b16 %v1044
        %v1057 = vunpack.c.l.b16 %v1045
        %v1058 = vunpack.c.l.b16 %v1046
        %v1059 = vunpack.c.l.b16 %v1047
        %v1060 = vpack.c.b16 %v1057, %v1056
        %v1061 = vpack.c.b16 %v1059, %v1058
        %v1065 = vsel %vm557, %v1043, 0
        %1067 = vmatpush.bf16.msra.mxu0 0
        %1068 = vmatpush.bf16.msra.mxu0 0
        %1069 = vmatpush.bf16.msra.mxu0 0
        %1070 = vmatpush.bf16.msra.mxu0 0
        %1071 = vmatpush.bf16.msra.mxu0 0
        %1072 = vmatpush.bf16.msra.mxu0 0
        %1073 = vmatpush.bf16.msra.mxu0 %v1061
        %1074 = vmatpush.bf16.msra.mxu0 %v1060
        %1075 = vmatmul.bf16.gmra.mxu0 %v1065
        %v1076 = vpop.f32.mrf.mxu0
        %v1077 = vadd.f32 %v1050, %v1076
        %v1078 = vpop.f32.mrf.mxu0
        %1079 = vdwg.mxu0
        %v1080 = vxor.u32 %v1077, 2147483648
        %v1081 = vmul.f32 %v1080, 1.442695
        %v1082 = vpow.pop %v1081
        %v1083 = vadd.f32 %v1082, 1.0
        %v1084 = vrcp.pop %v1083
        %v1085 = vmul.f32 %v1083, %v1084
        %v1086 = vsub.f32 1.0, %v1085
        %v1087 = vmul.f32 %v1084, %v1086
        %v1088 = vadd.f32 %v1084, %v1087
        %vm1089 = vweird.f32 %v1083
        %vm1090 = vweird.f32 %v1084
        %vm1091 = vmor %vm1089, %vm1090
        %v1092 = vsel %vm1091, %v1084, %v1088
        %v1093 = vand.u32 2147483647, %v1083
        %vm1094 = vcmp.eq.f32.partialorder %v1093, 8.507059e+37
        %v1095 = vand.u32 %v1083, 2147483648
        %v1096 = vor.u32 1.1754944e-38, %v1095
        %v1097 = vsel %vm1094, %v1096, %v1092
        %v1098 = vmul.f32 1.0, %v1097
        %v1099 = vmul.f32 %v1077, %v1098
        %v1100 = vpack.c.bf16 %v1099, %v1099
        %v1101 = vld [vmem:[%s12] sm:$0xf]
        %v1102 = vld [vmem:[%s12 + $0x4] sm:$0xf]
        %v1103 = vld [vmem:[%s12 + $0x8] sm:$0xf]
        %v1104 = vld [vmem:[%s12 + $0xc] sm:$0xf]
        %v1105 = vld [vmem:[%s12 + $0x10] sm:$0xf]
        %v1106 = vld [vmem:[%s12 + $0x14] sm:$0xf]
        %v1107 = vld [vmem:[%s12 + $0x18] sm:$0xf]
        %v1108 = vld [vmem:[%s12 + $0x1c] sm:$0xf]
        %v1109 = vld [vmem:[%s13] sm:$0x1]
        %v1111 = vperm.slane %v1109, 0
        %v1121 = vunpack.c.l.b16 %v1101
        %v1122 = vunpack.c.l.b16 %v1102
        %v1123 = vunpack.c.l.b16 %v1103
        %v1124 = vunpack.c.l.b16 %v1104
        %v1125 = vunpack.c.l.b16 %v1105
        %v1126 = vunpack.c.l.b16 %v1106
        %v1127 = vunpack.c.l.b16 %v1107
        %v1128 = vunpack.c.l.b16 %v1108
        %v1129 = vpack.c.b16 %v1122, %v1121
        %v1130 = vpack.c.b16 %v1124, %v1123
        %v1131 = vpack.c.b16 %v1126, %v1125
        %v1132 = vpack.c.b16 %v1128, %v1127
        %vm1137 = vcmask 523264
        %v1139 = vsel %vm1137, %v1100, 0
        %1141 = vmatpush.bf16.msra.mxu0 0
        %1142 = vmatpush.bf16.msra.mxu0 0
        %1143 = vmatpush.bf16.msra.mxu0 0
        %1144 = vmatpush.bf16.msra.mxu0 0
        %1145 = vmatpush.bf16.msra.mxu0 %v1132
        %1146 = vmatpush.bf16.msra.mxu0 %v1131
        %1147 = vmatpush.bf16.msra.mxu0 %v1130
        %1148 = vmatpush.bf16.msra.mxu0 %v1129
        %1149 = vmatmul.bf16.gmra.mxu0 %v1139
        %v1150 = vpop.f32.mrf.mxu0
        %v1151 = vadd.f32 %v1111, %v1150
        %v1152 = vpop.f32.mrf.mxu0
        %1153 = vdwg.mxu0
        %v1154 = vadd.f32 %v1010, %v1151
        %1155 = vst.msk [vmem:[%s545] sm:$0xff] %vm557, %v1154
        %s1156 = sand.u32 %s354, 1
        %s1157 = scalar_lea.sflag [#allocation4], %s1156
        %s1158 = sand.u32 %s354, 1
        %s1159 = smul.addr %s1158, 8
        %s1160 = scalar_lea.vmem [#allocation10], %s1159
        // Predicated region
        $region93: #{tpu_custom_call.1} parent=75 // pred_check
          %p1161 = pneg %p364
        $region94: #{tpu_custom_call.1} parent=75 // pred_check_branch
          %1163 = sbr.rel (%p1161) target = $region96
        $region95: #{tpu_custom_call.1} parent=75 // pred_region
          %1165 = vsyncadd %s1157, 0
          %s1166 = sadd.s32 %s36, %s35
          %s1167 = smul.addr %s1166, 8
          %s1168 = scalar_lea.hbm %s14, %s1167
          %s1170 = sshll.u32 %s1160, 4
          %s1171 = int_to_ptr.vmem [resolvable:$true] %s1170
          %s1172 = sshll.u32 %s1168, 4
          %s1173 = int_to_ptr.hbm [resolvable:$true] %s1172
          %1175 = dma.vmem_to_hbm [thread:$0]  %s1171, 128, %s1173, %s1157
        $region96: #{tpu_custom_call.1} parent=75 // pred_fallthru
          _
      $region76: #{tpu_custom_call.1} parent=5 // pred_fallthru
        _
      %p1176 = scmp.le.s32.totalorder 2, %s26
      // Predicated region
      $region97: #{tpu_custom_call.1} parent=5 // pred_check
        %p1177 = pneg %p1176
      $region98: #{tpu_custom_call.1} parent=5 // pred_check_branch
        %1179 = sbr.rel (%p1177) target = $region100
      $region99: #{tpu_custom_call.1} parent=5 // pred_region
        %s1180 = ssub.s32 %s26, 2
        // Predicated region
        $region101: #{tpu_custom_call.1} parent=99 // pred_check
          %p1181 = pneg %p370
        $region102: #{tpu_custom_call.1} parent=99 // pred_check_branch
          %1183 = sbr.rel (%p1181) target = $region104
        $region103: #{tpu_custom_call.1} parent=99 // pred_region
          %s1184 = sand.u32 %s355, 1
          %s1185 = scalar_lea.sflag [#allocation4], %s1184
          %s1186 = sand.u32 %s355, 1
          %s1187 = smul.addr %s1186, 8
          %s1188 = scalar_lea.vmem [#allocation10], %s1187
          %1190 = dma.done %s1185, 128
        $region104: #{tpu_custom_call.1} parent=99 // pred_fallthru
          _
      $region100: #{tpu_custom_call.1} parent=5 // pred_fallthru
        _
    $region6: #{tpu_custom_call.1} parent=1 // loop_footer
      %s30 = sadd.s32 1, %s26
    $region7: #{tpu_custom_call.1} parent=1 // loop_footer_branch
      %25 = sbr.rel target = $region3
    $region8: #{tpu_custom_call.1} parent=1 // loop_exit
      _
    %1191 = vsyncpa [#allocation3], 1
    %s1192 = scalar_lea.sflag [#allocation3], 1
    %1193 = vsyncpa %s1192, 1
    %1194 = vsyncpa [#allocation6], 1
    %1195 = vsyncpa [#allocation9], 1
    %1196 = vsyncpa [#allocation4], 1
    %s1197 = scalar_lea.sflag [#allocation4], 1
    %1198 = vsyncpa %s1197, 1

</llo_original>
